<compile_context>
chip_gen: v7x
topology: tpu7x:2x2x1
jax: 0.10.0
libtpu: 0.0.40
codegen_flags: <defaults>
</compile_context>

<pallas_src>
import functools

import jax
import jax.numpy as jnp
from jax.experimental import pallas as pl
from jax.experimental.pallas import tpu as pltpu


def _ds(start, size, stride):
    # pl.ds with an explicit stride only when it is actually strided.
    return pl.ds(start, size) if stride == 1 else pl.ds(start, size, stride)


def _conv_kernel_fold(x_ref, w_ref, o_ref, *, KH, KW, sh, sw, TOH, OW):
    """One (batch, Cout-tile, M-tile) step: fused im2col + single GEMM.

    x_ref : (1, Hp, Wp, Cin)       zero-padded NHWC image (resident per batch)
    w_ref : (KH*KW*Cin, TCout)     K-folded filter slab for this Cout tile
    o_ref : (1, TOH*OW, TCout)     lane-dense output M-tile
    """
    cin = x_ref.shape[-1]
    tm = TOH * OW
    m = pl.program_id(2)
    h0 = pl.multiple_of(m * (TOH * sh), TOH * sh)
    cols = []
    for kh in range(KH):                       # static, fully unrolled
        for kw in range(KW):
            win = x_ref[0, _ds(h0 + kh, TOH, sh), _ds(kw, OW, sw), :]
            cols.append(win.reshape(tm, cin))
    patch = jnp.concatenate(cols, axis=-1)     # (TM, KH*KW*Cin)
    o_ref[0] = jnp.dot(
        patch, w_ref[...], preferred_element_type=jnp.float32
    ).astype(o_ref.dtype)


def _conv_kernel_taps(x_ref, w_ref, o_ref, *, KH, KW, sh, sw, TOH, OW):
    """Per-tap GEMM path for large KH*KW*Cin (im2col patch would be too big).

    x_ref : (1, Hp, Wp, Cin)
    w_ref : (KH, KW, Cin, TCout)
    o_ref : (1, TOH*OW, TCout)
    """
    cin = x_ref.shape[-1]
    tm = TOH * OW
    m = pl.program_id(2)
    h0 = pl.multiple_of(m * (TOH * sh), TOH * sh)
    acc = None
    for kh in range(KH):
        for kw in range(KW):
            win = x_ref[0, _ds(h0 + kh, TOH, sh), _ds(kw, OW, sw), :]
            term = jnp.dot(win.reshape(tm, cin), w_ref[kh, kw],
                           preferred_element_type=jnp.float32)
            # accumulator initialised from the first tap (no zeros + add)
            acc = term if acc is None else acc + term
    o_ref[0] = acc.astype(o_ref.dtype)


def _pick_toh(OH, OW, target_rows=1024):
    """Largest TOH dividing OH with TM=TOH*OW sublane-aligned and <= target."""
    cands = [t for t in range(1, OH + 1)
             if OH % t == 0 and (t * OW) % 8 == 0 and t * OW <= target_rows]
    # Fallback: the whole spatial slab (block == full array dim, always legal).
    return max(cands) if cands else OH


def basic_conv2d(x_nchw, weight_oihw, stride, padding, *, compute_dtype=None):
    """BasicConv2d.forward: 2-D convolution, no bias.  Returns NCHW output."""
    if isinstance(stride, int):
        stride = (stride, stride)
    if isinstance(padding, int):
        padding = (padding, padding)

    N, Cin, H, W = x_nchw.shape
    Cout, Cin_w, KH, KW = weight_oihw.shape
    assert Cin == Cin_w, "channel mismatch"
    sh, sw = stride
    ph, pw = padding

    out_dtype = x_nchw.dtype
    # compute_dtype=jnp.bfloat16 is profitable on v5e/v6e/v7x alike (bf16 MXU);
    # accumulation stays f32 inside the kernel.
    cdt = x_nchw.dtype if compute_dtype is None else compute_dtype

    # --- layout glue: NCHW -> NHWC, zero-pad spatial (nn.Conv2d semantics) ---
    x = jnp.transpose(x_nchw, (0, 2, 3, 1)).astype(cdt)
    x = jnp.pad(x, ((0, 0), (ph, ph), (pw, pw), (0, 0)))
    Hp, Wp = H + 2 * ph, W + 2 * pw
    OH = (Hp - KH) // sh + 1
    OW = (Wp - KW) // sw + 1

    # --- weight prep: OIHW -> (KH, KW, Cin, Cout_pad), lane-dense Cout ---
    LANE = 128
    Cout_pad = ((Cout + LANE - 1) // LANE) * LANE
    w = jnp.transpose(weight_oihw, (2, 3, 1, 0)).astype(cdt)
    w = jnp.pad(w, ((0, 0), (0, 0), (0, 0), (0, Cout_pad - Cout)))

    # Fold KH*KW into the contraction dim when K stays MXU-sized: one matmul
    # per step, K = KH*KW*Cin (e.g. 9..576) instead of K = Cin (1..4 in stems).
    fold_k = (KH * KW * Cin) <= 512
    if fold_k:
        w = w.reshape(KH * KW * Cin, Cout_pad)   # row order = (kh, kw, ci)

    # Cout tile.  128/256 naturally match v5e (4x128^2) / v6e-v7x (2x256^2).
    if Cout_pad <= 512:
        TCout = Cout_pad
    elif Cout_pad % 512 == 0:
        TCout = 512
    elif Cout_pad % 256 == 0:
        TCout = 256
    else:
        TCout = 128

    # M tile over the flattened OH*OW spatial dim.
    TOH = _pick_toh(OH, OW, target_rows=1024)
    TM = TOH * OW
    m_tiles = OH // TOH

    # Grid order: (batch, Cout-tile, M-tile) with M innermost -> the weight
    # block (index depends only on j) stays resident across the whole M sweep,
    # and the padded image block (index depends only on n) is fetched from HBM
    # once per batch element.
    grid = (N, Cout_pad // TCout, m_tiles)

    if fold_k:
        kernel = functools.partial(_conv_kernel_fold,
                                   KH=KH, KW=KW, sh=sh, sw=sw, TOH=TOH, OW=OW)
        w_spec = pl.BlockSpec((KH * KW * Cin, TCout), lambda n, j, m: (0, j))
    else:
        kernel = functools.partial(_conv_kernel_taps,
                                   KH=KH, KW=KW, sh=sh, sw=sw, TOH=TOH, OW=OW)
        w_spec = pl.BlockSpec((KH, KW, Cin, TCout),
                              lambda n, j, m: (0, 0, 0, j))

    # --- per-step VMEM footprint -> explicit vmem_limit_bytes (all gens) ---
    itemsize = jnp.dtype(cdt).itemsize
    out_itemsize = jnp.dtype(out_dtype).itemsize
    x_block_b = Hp * Wp * Cin * itemsize
    w_block_b = KH * KW * Cin * TCout * itemsize
    o_block_b = TM * TCout * out_itemsize
    patch_b = TM * KH * KW * Cin * itemsize if fold_k else 0
    acc_b = TM * TCout * 4                       # f32 matmul result
    footprint = 2 * (x_block_b + w_block_b + o_block_b) + patch_b + acc_b
    vmem_limit = min(max(int(1.5 * footprint) + (2 << 20), 16 << 20), 48 << 20)

    # Cost estimate with the *unpadded* Cout (advisory to XLA's scheduler).
    flops = 2 * N * OH * OW * KH * KW * Cin * Cout
    bytes_accessed = (N * Hp * Wp * Cin * itemsize
                      + KH * KW * Cin * Cout * itemsize
                      + N * OH * OW * Cout * out_itemsize)

    out = pl.pallas_call(
        kernel,
        out_shape=jax.ShapeDtypeStruct((N, OH * OW, Cout_pad), out_dtype),
        grid_spec=pltpu.PrefetchScalarGridSpec(
            num_scalar_prefetch=0,
            grid=grid,
            in_specs=[
                # Full padded image per batch element (carries the KH/KW halo);
                # block index constant across (j, m) -> one HBM fetch per n.
                pl.BlockSpec((1, Hp, Wp, Cin), lambda n, j, m: (n, 0, 0, 0)),
                w_spec,
            ],
            out_specs=pl.BlockSpec((1, TM, TCout), lambda n, j, m: (n, m, j)),
        ),
        compiler_params=pltpu.CompilerParams(
            dimension_semantics=("parallel", "parallel", "parallel"),
            vmem_limit_bytes=vmem_limit),
        cost_estimate=pl.CostEstimate(
            flops=flops, transcendentals=0, bytes_accessed=bytes_accessed),
    )(x, w)

    out = out.reshape(N, OH, OW, Cout_pad)[..., :Cout]   # drop lane padding
    return jnp.transpose(out, (0, 3, 1, 2))              # NHWC -> NCHW


if __name__ == "__main__":
    key = jax.random.PRNGKey(0)

    # (N, Cin, H, W, Cout, k, stride, padding)
    configs = [
        (2, 4, 16, 16, 8, 3, 1, 1),    # BasicConv2d(4, 8, 3, 1, 1), spec shape
        (1, 3, 40, 40, 16, 3, 1, 1),   # multiple M tiles (dynamic row offset)
        (1, 64, 8, 8, 32, 3, 1, 1),    # KH*KW*Cin > 512 -> per-tap GEMM path
    ]

    for cfg_idx, (N, Cin, H, W, Cout, Ksz, stride, padding) in enumerate(configs):
        key, kx, kw_key = jax.random.split(key, 3)
        x = jax.random.normal(kx, (N, Cin, H, W), dtype=jnp.float32)

        # Deterministic init mimicking nn.Conv2d's default kaiming-uniform bound.
        fan_in = Cin * Ksz * Ksz
        bound = 1.0 / (fan_in ** 0.5)
        weight = jax.random.uniform(
            kw_key, (Cout, Cin, Ksz, Ksz), dtype=jnp.float32,
            minval=-bound, maxval=bound)

        y = jax.block_until_ready(basic_conv2d(x, weight, stride, padding))

        # Reference: XLA conv with torch.nn.Conv2d(bias=False) semantics.
        y_ref = jax.lax.conv_general_dilated(
            x, weight, window_strides=(stride, stride),
            padding=((padding, padding), (padding, padding)),
            dimension_numbers=("NCHW", "OIHW", "NCHW"))

        assert y.shape == y_ref.shape, (cfg_idx, y.shape, y_ref.shape)
        max_err = float(jnp.max(jnp.abs(y - y_ref)))
        assert jnp.allclose(y, y_ref, rtol=1e-2, atol=1e-2), (cfg_idx, max_err)

    print("KERNEL_OK")
</pallas_src>

<mosaic_0001>
module attributes {stable_mosaic.version = 11 : i64} {
  func.func @_conv_kernel_fold(%arg0: i32, %arg1: i32, %arg2: i32, %arg3: memref<1x18x18x4xf32, #tpu.memory_space<vmem>>, %arg4: memref<36x128xf32, #tpu.memory_space<vmem>>, %arg5: memref<1x256x128xf32, #tpu.memory_space<vmem>>) attributes {dimension_semantics = [#tpu.dimension_semantics<parallel>, #tpu.dimension_semantics<parallel>, #tpu.dimension_semantics<parallel>], iteration_bounds = array<i64: 2, 1, 1>, scalar_prefetch = 0 : i64, scratch_operands = 0 : i64, tpu.core_type = #tpu.core_type<tc>, window_params = [{transform_indices = @transform_0, window_bounds = array<i64: 1, 18, 18, 4>}, {transform_indices = @transform_1, window_bounds = array<i64: 36, 128>}, {transform_indices = @transform_2, window_bounds = array<i64: 1, 256, 128>}]} {
    %c16_i32 = arith.constant 16 : i32
    %0 = arith.muli %arg2, %c16_i32 : i32
    %1 = tpu.assume_multiple %0, 16 : i32
    %c0_i32 = arith.constant 0 : i32
    %2 = arith.addi %1, %c0_i32 : i32
    %c0 = arith.constant 0 : index
    %3 = arith.index_cast %2 : i32 to index
    %c0_0 = arith.constant 0 : index
    %c0_1 = arith.constant 0 : index
    %4 = vector.load %arg3[%c0, %3, %c0_0, %c0_1] : memref<1x18x18x4xf32, #tpu.memory_space<vmem>>, vector<1x16x16x4xf32>
    %5 = vector.shape_cast %4 : vector<1x16x16x4xf32> to vector<16x16x4xf32>
    %6 = vector.shape_cast %5 : vector<16x16x4xf32> to vector<256x4xf32>
    %c0_i32_2 = arith.constant 0 : i32
    %7 = arith.addi %1, %c0_i32_2 : i32
    %c0_3 = arith.constant 0 : index
    %8 = arith.index_cast %7 : i32 to index
    %c1 = arith.constant 1 : index
    %c0_4 = arith.constant 0 : index
    %9 = vector.load %arg3[%c0_3, %8, %c1, %c0_4] : memref<1x18x18x4xf32, #tpu.memory_space<vmem>>, vector<1x16x16x4xf32>
    %10 = vector.shape_cast %9 : vector<1x16x16x4xf32> to vector<16x16x4xf32>
    %11 = vector.shape_cast %10 : vector<16x16x4xf32> to vector<256x4xf32>
    %c0_i32_5 = arith.constant 0 : i32
    %12 = arith.addi %1, %c0_i32_5 : i32
    %c0_6 = arith.constant 0 : index
    %13 = arith.index_cast %12 : i32 to index
    %c2 = arith.constant 2 : index
    %c0_7 = arith.constant 0 : index
    %14 = vector.load %arg3[%c0_6, %13, %c2, %c0_7] : memref<1x18x18x4xf32, #tpu.memory_space<vmem>>, vector<1x16x16x4xf32>
    %15 = vector.shape_cast %14 : vector<1x16x16x4xf32> to vector<16x16x4xf32>
    %16 = vector.shape_cast %15 : vector<16x16x4xf32> to vector<256x4xf32>
    %c1_i32 = arith.constant 1 : i32
    %17 = arith.addi %1, %c1_i32 : i32
    %c0_8 = arith.constant 0 : index
    %18 = arith.index_cast %17 : i32 to index
    %c0_9 = arith.constant 0 : index
    %c0_10 = arith.constant 0 : index
    %19 = vector.load %arg3[%c0_8, %18, %c0_9, %c0_10] : memref<1x18x18x4xf32, #tpu.memory_space<vmem>>, vector<1x16x16x4xf32>
    %20 = vector.shape_cast %19 : vector<1x16x16x4xf32> to vector<16x16x4xf32>
    %21 = vector.shape_cast %20 : vector<16x16x4xf32> to vector<256x4xf32>
    %c1_i32_11 = arith.constant 1 : i32
    %22 = arith.addi %1, %c1_i32_11 : i32
    %c0_12 = arith.constant 0 : index
    %23 = arith.index_cast %22 : i32 to index
    %c1_13 = arith.constant 1 : index
    %c0_14 = arith.constant 0 : index
    %24 = vector.load %arg3[%c0_12, %23, %c1_13, %c0_14] : memref<1x18x18x4xf32, #tpu.memory_space<vmem>>, vector<1x16x16x4xf32>
    %25 = vector.shape_cast %24 : vector<1x16x16x4xf32> to vector<16x16x4xf32>
    %26 = vector.shape_cast %25 : vector<16x16x4xf32> to vector<256x4xf32>
    %c1_i32_15 = arith.constant 1 : i32
    %27 = arith.addi %1, %c1_i32_15 : i32
    %c0_16 = arith.constant 0 : index
    %28 = arith.index_cast %27 : i32 to index
    %c2_17 = arith.constant 2 : index
    %c0_18 = arith.constant 0 : index
    %29 = vector.load %arg3[%c0_16, %28, %c2_17, %c0_18] : memref<1x18x18x4xf32, #tpu.memory_space<vmem>>, vector<1x16x16x4xf32>
    %30 = vector.shape_cast %29 : vector<1x16x16x4xf32> to vector<16x16x4xf32>
    %31 = vector.shape_cast %30 : vector<16x16x4xf32> to vector<256x4xf32>
    %c2_i32 = arith.constant 2 : i32
    %32 = arith.addi %1, %c2_i32 : i32
    %c0_19 = arith.constant 0 : index
    %33 = arith.index_cast %32 : i32 to index
    %c0_20 = arith.constant 0 : index
    %c0_21 = arith.constant 0 : index
    %34 = vector.load %arg3[%c0_19, %33, %c0_20, %c0_21] : memref<1x18x18x4xf32, #tpu.memory_space<vmem>>, vector<1x16x16x4xf32>
    %35 = vector.shape_cast %34 : vector<1x16x16x4xf32> to vector<16x16x4xf32>
    %36 = vector.shape_cast %35 : vector<16x16x4xf32> to vector<256x4xf32>
    %c2_i32_22 = arith.constant 2 : i32
    %37 = arith.addi %1, %c2_i32_22 : i32
    %c0_23 = arith.constant 0 : index
    %38 = arith.index_cast %37 : i32 to index
    %c1_24 = arith.constant 1 : index
    %c0_25 = arith.constant 0 : index
    %39 = vector.load %arg3[%c0_23, %38, %c1_24, %c0_25] : memref<1x18x18x4xf32, #tpu.memory_space<vmem>>, vector<1x16x16x4xf32>
    %40 = vector.shape_cast %39 : vector<1x16x16x4xf32> to vector<16x16x4xf32>
    %41 = vector.shape_cast %40 : vector<16x16x4xf32> to vector<256x4xf32>
    %c2_i32_26 = arith.constant 2 : i32
    %42 = arith.addi %1, %c2_i32_26 : i32
    %c0_27 = arith.constant 0 : index
    %43 = arith.index_cast %42 : i32 to index
    %c2_28 = arith.constant 2 : index
    %c0_29 = arith.constant 0 : index
    %44 = vector.load %arg3[%c0_27, %43, %c2_28, %c0_29] : memref<1x18x18x4xf32, #tpu.memory_space<vmem>>, vector<1x16x16x4xf32>
    %45 = vector.shape_cast %44 : vector<1x16x16x4xf32> to vector<16x16x4xf32>
    %46 = vector.shape_cast %45 : vector<16x16x4xf32> to vector<256x4xf32>
    %47 = tpu.concatenate %6, %11, %16, %21, %26, %31, %36, %41, %46 in 1 : vector<256x4xf32>, vector<256x4xf32>, vector<256x4xf32>, vector<256x4xf32>, vector<256x4xf32>, vector<256x4xf32>, vector<256x4xf32>, vector<256x4xf32>, vector<256x4xf32> -> vector<256x36xf32>
    %c0_30 = arith.constant 0 : index
    %c0_31 = arith.constant 0 : index
    %48 = vector.load %arg4[%c0_30, %c0_31] : memref<36x128xf32, #tpu.memory_space<vmem>>, vector<36x128xf32>
    %cst = arith.constant dense<0.000000e+00> : vector<256x128xf32>
    %49 = tpu.matmul %47, %48, %cst {dimension_numbers = #tpu.dot_dimension_numbers<[1], [0], [0], [1], [0, 0, 1, 1], [], []>} : vector<256x36xf32>, vector<36x128xf32>, vector<256x128xf32> -> vector<256x128xf32>
    %c0_32 = arith.constant 0 : index
    %c0_33 = arith.constant 0 : index
    %c0_34 = arith.constant 0 : index
    %50 = vector.load %arg5[%c0_32, %c0_33, %c0_34] : memref<1x256x128xf32, #tpu.memory_space<vmem>>, vector<1x256x128xf32>
    %51 = vector.shape_cast %50 : vector<1x256x128xf32> to vector<256x128xf32>
    %52 = vector.shape_cast %49 : vector<256x128xf32> to vector<1x256x128xf32>
    tpu.vector_store %arg5[%c0_32, %c0_33, %c0_34], %52 {strides = array<i32>} : memref<1x256x128xf32, #tpu.memory_space<vmem>>, vector<1x256x128xf32>,
    return
  }
  func.func @transform_0(%arg0: i32, %arg1: i32, %arg2: i32) -> (i32, i32, i32, i32) {
    %c0_i32 = arith.constant 0 : i32
    %c0_i32_0 = arith.constant 0 : i32
    %c0_i32_1 = arith.constant 0 : i32
    %c0_i32_2 = arith.constant 0 : i32
    return %arg0, %c0_i32, %c0_i32_0, %c0_i32_1 : i32, i32, i32, i32
  }
  func.func @transform_1(%arg0: i32, %arg1: i32, %arg2: i32) -> (i32, i32) {
    %c0_i32 = arith.constant 0 : i32
    %c0_i32_0 = arith.constant 0 : i32
    return %c0_i32, %arg1 : i32, i32
  }
  func.func @transform_2(%arg0: i32, %arg1: i32, %arg2: i32) -> (i32, i32, i32) {
    %c0_i32 = arith.constant 0 : i32
    return %arg0, %arg2, %arg1 : i32, i32, i32
  }
}

</mosaic_0001>

<llo_original>
// kernel: tpu_custom_call.1
$region0: #{tpu_custom_call.1}
  #allocation0 [shape = 'u32[]', space=smem, size = 0x4, offset = 0x4, fixed_abs, tag = 'smem constant byte address 0x4 - core index']
  #allocation1 [shape = 'u32[144,128]{1,0:T(1,128)}', space=vmem, size = 0x12000, scoped, tag = 'internal scratch']
  %s0 = inlined_call_operand.vmem [shape: f32[2,18,18,4], index: 0, kind: input, shape index: {}]
  %s1 = inlined_call_operand.vmem [shape: f32[36,128], index: 1, kind: input, shape index: {}]
  %s2 = inlined_call_operand.hbm [shape: f32[2,256,128], index: 2, kind: output, shape index: {}]
  %s3 = sld [smem:[#allocation0]]
  $region41: #{tpu_custom_call.1} parent=0
    _
  %s5 = ssub.s32 1, %s3
  %s6 = scalar_select 0, %s5, %s3
  $region1: #{tpu_custom_call.1} parent=0
    #allocation2 [shape = 'u8[262144]{0}', space=vmem, size = 0x40000, scoped, tag = 'output window, operand 0']
    #allocation3 [shape = 's32[2]{0}', space=sflag, size = 0x8, scoped, tag = 'scoped memory for tpu_custom_call.1']
    %7 = vsyncpa [#allocation3], 0
    %s8 = scalar_lea.sflag [#allocation3], 1
    %9 = vsyncpa %s8, 0
    loop: start=0, step=1, limit=4
    $region2: #{tpu_custom_call.1} parent=1 // loop_pre_header
      _
    $region3: #{tpu_custom_call.1} parent=1 // loop_header
      %s11 = sphi 0, %s15
      %p12 = scmp.ge.s32.totalorder %s11, 4
      %s18 = sphi 0, %s37
      %s19 = sphi 0, %s33
      %s20 = sphi 0, %s29
      %s21 = sphi 0, %s18
      %s22 = sphi 0, %s19
      %s23 = sphi 0, %s20
      %s24 = sphi 0, %s21
      %s25 = sphi 0, %s22
      %s26 = sphi 0, %s23
      %s40 = sphi 0, %s42
      %s43 = sphi 0, %s40
      %s44 = sphi 0, %s43
      %s60 = sphi 0, %s44
      %s66 = sphi 0, %s68
      %s69 = sphi 0, %s66
      %s70 = sphi 0, %s69
      %s86 = sphi 0, %s70
      %s96 = sphi 0, %s98
      %s99 = sphi 0, %s96
      %s100 = sphi 0, %s99
      %s116 = sphi 0, %s100
    $region4: #{tpu_custom_call.1} parent=1 // loop_header_branch
      %14 = sbr.rel (%p12) target = $region8
    $region5: #{tpu_custom_call.1} parent=1 // loop_body
      %s16 = ssub.s32 %s11, 1
      %s17 = ssub.s32 %s11, 2
      %s27 = sadd.s32 1, %s20
      %p28 = scmp.ge.s32.totalorder %s27, 1
      %s29 = scalar_select %p28, 0, %s27
      %s30 = sadd.s32 1, %s19
      %s31 = scalar_select %p28, %s30, %s19
      %p32 = scmp.ge.s32.totalorder %s31, 1
      %s33 = scalar_select %p32, 0, %s31
      %s34 = sadd.s32 1, %s18
      %s35 = scalar_select %p32, %s34, %s18
      %p36 = scmp.ge.s32.totalorder %s35, 2
      %s37 = scalar_select %p36, 0, %s35
      %s38 = ssub.s32 %s18, %s37
      %p39 = scmp.eq.s32.totalorder %s38, 0
      %s41 = sadd.s32 %s40, 1
      %s42 = scalar_select %p39, %s40, %s41
      %p45 = pneg %p39
      %p46 = scmp.eq.s32.totalorder %s11, 1
      %p47 = por %p45, %p46
      %p48 = scmp.ne.s32.totalorder %s40, %s43
      %p49 = scmp.eq.s32.totalorder %s11, 0
      %p50 = por %p48, %p49
      %p51 = scmp.ne.s32.totalorder %s40, %s43
      %p52 = scmp.eq.s32.totalorder %s16, 1
      %p53 = por %p51, %p52
      %p54 = scmp.ne.s32.totalorder %s43, %s44
      %p55 = scmp.eq.s32.totalorder %s16, 0
      %p56 = por %p54, %p55
      %p57 = scmp.ne.s32.totalorder %s43, %s44
      %p58 = scmp.eq.s32.totalorder %s17, 1
      %p59 = por %p57, %p58
      %p61 = scmp.ne.s32.totalorder %s44, %s60
      %p62 = scmp.eq.s32.totalorder %s17, 0
      %p63 = por %p61, %p62
      %s64 = ssub.s32 %s19, %s33
      %p65 = scmp.eq.s32.totalorder %s64, 0
      %s67 = sadd.s32 %s66, 1
      %s68 = scalar_select %p65, %s66, %s67
      %p71 = pneg %p65
      %p72 = scmp.eq.s32.totalorder %s11, 1
      %p73 = por %p71, %p72
      %p74 = scmp.ne.s32.totalorder %s66, %s69
      %p75 = scmp.eq.s32.totalorder %s11, 0
      %p76 = por %p74, %p75
      %p77 = scmp.ne.s32.totalorder %s66, %s69
      %p78 = scmp.eq.s32.totalorder %s16, 1
      %p79 = por %p77, %p78
      %p80 = scmp.ne.s32.totalorder %s69, %s70
      %p81 = scmp.eq.s32.totalorder %s16, 0
      %p82 = por %p80, %p81
      %p83 = scmp.ne.s32.totalorder %s69, %s70
      %p84 = scmp.eq.s32.totalorder %s17, 1
      %p85 = por %p83, %p84
      %p87 = scmp.ne.s32.totalorder %s70, %s86
      %p88 = scmp.eq.s32.totalorder %s17, 0
      %p89 = por %p87, %p88
      %s90 = ssub.s32 %s18, %s37
      %s91 = ssub.s32 %s20, %s29
      %s92 = sor.u32 %s90, %s91
      %s93 = ssub.s32 %s19, %s33
      %s94 = sor.u32 %s92, %s93
      %p95 = scmp.eq.s32.totalorder %s94, 0
      %s97 = sadd.s32 %s96, 1
      %s98 = scalar_select %p95, %s96, %s97
      %p101 = pneg %p95
      %p102 = scmp.eq.s32.totalorder %s11, 1
      %p103 = por %p101, %p102
      %p104 = scmp.ne.s32.totalorder %s96, %s99
      %p105 = scmp.eq.s32.totalorder %s11, 0
      %p106 = por %p104, %p105
      %p107 = scmp.ne.s32.totalorder %s96, %s99
      %p108 = scmp.eq.s32.totalorder %s16, 1
      %p109 = por %p107, %p108
      %p110 = scmp.ne.s32.totalorder %s99, %s100
      %p111 = scmp.eq.s32.totalorder %s16, 0
      %p112 = por %p110, %p111
      %p113 = scmp.ne.s32.totalorder %s99, %s100
      %p114 = scmp.eq.s32.totalorder %s17, 1
      %p115 = por %p113, %p114
      %p117 = scmp.ne.s32.totalorder %s100, %s116
      %p118 = scmp.eq.s32.totalorder %s17, 0
      %p119 = por %p117, %p118
      %p120 = scmp.le.s32.totalorder 1, %s11
      %p121 = scmp.lt.s32.totalorder %s11, 3
      %p122 = pnand %p120, %p121
      %p123 = pneg %p122
      // Predicated region
      $region9: #{tpu_custom_call.1} parent=5 // pred_check
        _
      $region10: #{tpu_custom_call.1} parent=5 // pred_check_branch
        %125 = sbr.rel (%p122) target = $region12
      $region11: #{tpu_custom_call.1} parent=5 // pred_region
        %s126 = ssub.s32 %s11, 1
        // Predicated region
        $region13: #{tpu_custom_call.1} parent=11 // pred_check
          %p127 = pneg %p82
        $region14: #{tpu_custom_call.1} parent=11 // pred_check_branch
          %129 = sbr.rel (%p127) target = $region16
        $region15: #{tpu_custom_call.1} parent=11 // pred_region
          %p130 = scmp.lt.s32.totalorder %s22, 0
          %s131 = scalar_select %p130, %s22, 0
          %s132 = smul.addr %s131, 8
          %s133 = scalar_lea.vmem %s1, %s132
        $region16: #{tpu_custom_call.1} parent=11 // pred_fallthru
          _
      $region12: #{tpu_custom_call.1} parent=5 // pred_fallthru
        _
      %p134 = scmp.lt.s32.totalorder %s11, 2
      // Predicated region
      $region17: #{tpu_custom_call.1} parent=5 // pred_check
        %p135 = pneg %p134
      $region18: #{tpu_custom_call.1} parent=5 // pred_check_branch
        %137 = sbr.rel (%p135) target = $region20
      $region19: #{tpu_custom_call.1} parent=5 // pred_region
        // Predicated region
        $region21: #{tpu_custom_call.1} parent=19 // pred_check
          %p138 = pneg %p50
        $region22: #{tpu_custom_call.1} parent=19 // pred_check_branch
          %140 = sbr.rel (%p138) target = $region24
        $region23: #{tpu_custom_call.1} parent=19 // pred_region
          %p141 = scmp.lt.s32.totalorder %s18, 1
          %s142 = scalar_select %p141, %s18, 1
          %s143 = smul.addr %s142, 54
          %s144 = smul.addr %s143, 8
          %s145 = scalar_lea.vmem %s0, %s144
        $region24: #{tpu_custom_call.1} parent=19 // pred_fallthru
          _
      $region20: #{tpu_custom_call.1} parent=5 // pred_fallthru
        _
      %p146 = scmp.le.s32.totalorder 1, %s11
      %p147 = scmp.lt.s32.totalorder %s11, 3
      %p148 = pnand %p146, %p147
      %p149 = pneg %p148
      // Predicated region
      $region25: #{tpu_custom_call.1} parent=5 // pred_check
        _
      $region26: #{tpu_custom_call.1} parent=5 // pred_check_branch
        %151 = sbr.rel (%p148) target = $region28
      $region27: #{tpu_custom_call.1} parent=5 // pred_region
        %s152 = ssub.s32 %s11, 1
        %p153 = scmp.lt.s32.totalorder %s21, 1
        %s154 = scalar_select %p153, %s21, 1
        %s155 = smul.addr %s154, 54
        %s156 = smul.addr %s155, 8
        %s157 = scalar_lea.vmem %s0, %s156
        %p158 = pneg %p56
        %p159 = pneg %p53
        %p160 = scmp.lt.s32.totalorder %s22, 0
        %s161 = scalar_select %p160, %s22, 0
        %s162 = smul.addr %s161, 8
        %s163 = scalar_lea.vmem %s1, %s162
        %p164 = pneg %p82
        %p165 = pneg %p79
        %p166 = pneg %p112
        %p167 = pneg %p109
        %s168 = sand.u32 %s99, 1
        %s169 = scalar_lea.sflag [#allocation3], %s168
        %s170 = sand.u32 %s99, 1
        %s171 = smul.addr %s170, 256
        %s172 = scalar_lea.vmem [#allocation2], %s171
        %p173 = scmp.lt.s32.totalorder %s21, 1
        %s174 = scalar_select %p173, %s21, 1
        %s175 = smul.addr %s174, 54
        %s176 = smul.addr %s175, 8
        %s177 = scalar_lea.vmem %s0, %s176
        %p178 = scmp.lt.s32.totalorder %s22, 0
        %s179 = scalar_select %p178, %s22, 0
        %s180 = smul.addr %s179, 8
        %s181 = scalar_lea.vmem %s1, %s180
        %s182 = smul.u32 32, %s23
        %s183 = smul.u32 %s23, 16
        %s184 = smul.u32 %s183, 24
        %s185 = scalar_lea.vmem %s177, %s184
        %v186 = vld [vmem:[%s185] sm:$0xff]
        %v187 = vld [vmem:[%s185 + $0x8] sm:$0xff]
        %v188 = vld [vmem:[%s185 + $0x18] sm:$0xff]
        %v189 = vld [vmem:[%s185 + $0x20] sm:$0xff]
        %v190 = vld [vmem:[%s185 + $0x30] sm:$0xff]
        %v191 = vld [vmem:[%s185 + $0x38] sm:$0xff]
        %v192 = vld [vmem:[%s185 + $0x48] sm:$0xff]
        %v193 = vld [vmem:[%s185 + $0x50] sm:$0xff]
        %v194 = vld [vmem:[%s185 + $0x60] sm:$0xff]
        %v195 = vld [vmem:[%s185 + $0x68] sm:$0xff]
        %v196 = vld [vmem:[%s185 + $0x78] sm:$0xff]
        %v197 = vld [vmem:[%s185 + $0x80] sm:$0xff]
        %v198 = vld [vmem:[%s185 + $0x90] sm:$0xff]
        %v199 = vld [vmem:[%s185 + $0x98] sm:$0xff]
        %v200 = vld [vmem:[%s185 + $0xa8] sm:$0xff]
        %v201 = vld [vmem:[%s185 + $0xb0] sm:$0xff]
        %v202 = vld [vmem:[%s185 + $0xc0] sm:$0xff]
        %v203 = vld [vmem:[%s185 + $0xc8] sm:$0xff]
        %v204 = vld [vmem:[%s185 + $0xd8] sm:$0xff]
        %v205 = vld [vmem:[%s185 + $0xe0] sm:$0xff]
        %v206 = vld [vmem:[%s185 + $0xf0] sm:$0xff]
        %v207 = vld [vmem:[%s185 + $0xf8] sm:$0xff]
        %v208 = vld [vmem:[%s185 + $0x108] sm:$0xff]
        %v209 = vld [vmem:[%s185 + $0x110] sm:$0xff]
        %v210 = vld [vmem:[%s185 + $0x120] sm:$0xff]
        %v211 = vld [vmem:[%s185 + $0x128] sm:$0xff]
        %v212 = vld [vmem:[%s185 + $0x138] sm:$0xff]
        %v213 = vld [vmem:[%s185 + $0x140] sm:$0xff]
        %v214 = vld [vmem:[%s185 + $0x150] sm:$0xff]
        %v215 = vld [vmem:[%s185 + $0x158] sm:$0xff]
        %v216 = vld [vmem:[%s185 + $0x168] sm:$0xff]
        %v217 = vld [vmem:[%s185 + $0x170] sm:$0xff]
        %v218 = vld [vmem:[%s185 + $0x1] sm:$0xff]
        %v219 = vld [vmem:[%s185 + $0x9] sm:$0xff]
        %v220 = vld [vmem:[%s185 + $0x19] sm:$0xff]
        %v221 = vld [vmem:[%s185 + $0x21] sm:$0xff]
        %v222 = vld [vmem:[%s185 + $0x31] sm:$0xff]
        %v223 = vld [vmem:[%s185 + $0x39] sm:$0xff]
        %v224 = vld [vmem:[%s185 + $0x49] sm:$0xff]
        %v225 = vld [vmem:[%s185 + $0x51] sm:$0xff]
        %v226 = vld [vmem:[%s185 + $0x61] sm:$0xff]
        %v227 = vld [vmem:[%s185 + $0x69] sm:$0xff]
        %v228 = vld [vmem:[%s185 + $0x79] sm:$0xff]
        %v229 = vld [vmem:[%s185 + $0x81] sm:$0xff]
        %v230 = vld [vmem:[%s185 + $0x91] sm:$0xff]
        %v231 = vld [vmem:[%s185 + $0x99] sm:$0xff]
        %v232 = vld [vmem:[%s185 + $0xa9] sm:$0xff]
        %v233 = vld [vmem:[%s185 + $0xb1] sm:$0xff]
        %v234 = vld [vmem:[%s185 + $0xc1] sm:$0xff]
        %v235 = vld [vmem:[%s185 + $0xc9] sm:$0xff]
        %v236 = vld [vmem:[%s185 + $0xd9] sm:$0xff]
        %v237 = vld [vmem:[%s185 + $0xe1] sm:$0xff]
        %v238 = vld [vmem:[%s185 + $0xf1] sm:$0xff]
        %v239 = vld [vmem:[%s185 + $0xf9] sm:$0xff]
        %v240 = vld [vmem:[%s185 + $0x109] sm:$0xff]
        %v241 = vld [vmem:[%s185 + $0x111] sm:$0xff]
        %v242 = vld [vmem:[%s185 + $0x121] sm:$0xff]
        %v243 = vld [vmem:[%s185 + $0x129] sm:$0xff]
        %v244 = vld [vmem:[%s185 + $0x139] sm:$0xff]
        %v245 = vld [vmem:[%s185 + $0x141] sm:$0xff]
        %v246 = vld [vmem:[%s185 + $0x151] sm:$0xff]
        %v247 = vld [vmem:[%s185 + $0x159] sm:$0xff]
        %v248 = vld [vmem:[%s185 + $0x169] sm:$0xff]
        %v249 = vld [vmem:[%s185 + $0x171] sm:$0xff]
        %v250 = vld [vmem:[%s185 + $0x2] sm:$0xff]
        %v251 = vld [vmem:[%s185 + $0xa] sm:$0xff]
        %v252 = vld [vmem:[%s185 + $0x1a] sm:$0xff]
        %v253 = vld [vmem:[%s185 + $0x22] sm:$0xff]
        %v254 = vld [vmem:[%s185 + $0x32] sm:$0xff]
        %v255 = vld [vmem:[%s185 + $0x3a] sm:$0xff]
        %v256 = vld [vmem:[%s185 + $0x4a] sm:$0xff]
        %v257 = vld [vmem:[%s185 + $0x52] sm:$0xff]
        %v258 = vld [vmem:[%s185 + $0x62] sm:$0xff]
        %v259 = vld [vmem:[%s185 + $0x6a] sm:$0xff]
        %v260 = vld [vmem:[%s185 + $0x7a] sm:$0xff]
        %v261 = vld [vmem:[%s185 + $0x82] sm:$0xff]
        %v262 = vld [vmem:[%s185 + $0x92] sm:$0xff]
        %v263 = vld [vmem:[%s185 + $0x9a] sm:$0xff]
        %v264 = vld [vmem:[%s185 + $0xaa] sm:$0xff]
        %v265 = vld [vmem:[%s185 + $0xb2] sm:$0xff]
        %v266 = vld [vmem:[%s185 + $0xc2] sm:$0xff]
        %v267 = vld [vmem:[%s185 + $0xca] sm:$0xff]
        %v268 = vld [vmem:[%s185 + $0xda] sm:$0xff]
        %v269 = vld [vmem:[%s185 + $0xe2] sm:$0xff]
        %v270 = vld [vmem:[%s185 + $0xf2] sm:$0xff]
        %v271 = vld [vmem:[%s185 + $0xfa] sm:$0xff]
        %v272 = vld [vmem:[%s185 + $0x10a] sm:$0xff]
        %v273 = vld [vmem:[%s185 + $0x112] sm:$0xff]
        %v274 = vld [vmem:[%s185 + $0x122] sm:$0xff]
        %v275 = vld [vmem:[%s185 + $0x12a] sm:$0xff]
        %v276 = vld [vmem:[%s185 + $0x13a] sm:$0xff]
        %v277 = vld [vmem:[%s185 + $0x142] sm:$0xff]
        %v278 = vld [vmem:[%s185 + $0x152] sm:$0xff]
        %v279 = vld [vmem:[%s185 + $0x15a] sm:$0xff]
        %v280 = vld [vmem:[%s185 + $0x16a] sm:$0xff]
        %v281 = vld [vmem:[%s185 + $0x172] sm:$0xff]
        %s282 = sadd.s32 %s183, 1
        %s283 = smul.u32 %s282, 24
        %s284 = scalar_lea.vmem %s177, %s283
        %v285 = vld [vmem:[%s284] sm:$0xff]
        %v286 = vld [vmem:[%s284 + $0x8] sm:$0xff]
        %v287 = vld [vmem:[%s284 + $0x18] sm:$0xff]
        %v288 = vld [vmem:[%s284 + $0x20] sm:$0xff]
        %v289 = vld [vmem:[%s284 + $0x30] sm:$0xff]
        %v290 = vld [vmem:[%s284 + $0x38] sm:$0xff]
        %v291 = vld [vmem:[%s284 + $0x48] sm:$0xff]
        %v292 = vld [vmem:[%s284 + $0x50] sm:$0xff]
        %v293 = vld [vmem:[%s284 + $0x60] sm:$0xff]
        %v294 = vld [vmem:[%s284 + $0x68] sm:$0xff]
        %v295 = vld [vmem:[%s284 + $0x78] sm:$0xff]
        %v296 = vld [vmem:[%s284 + $0x80] sm:$0xff]
        %v297 = vld [vmem:[%s284 + $0x90] sm:$0xff]
        %v298 = vld [vmem:[%s284 + $0x98] sm:$0xff]
        %v299 = vld [vmem:[%s284 + $0xa8] sm:$0xff]
        %v300 = vld [vmem:[%s284 + $0xb0] sm:$0xff]
        %v301 = vld [vmem:[%s284 + $0xc0] sm:$0xff]
        %v302 = vld [vmem:[%s284 + $0xc8] sm:$0xff]
        %v303 = vld [vmem:[%s284 + $0xd8] sm:$0xff]
        %v304 = vld [vmem:[%s284 + $0xe0] sm:$0xff]
        %v305 = vld [vmem:[%s284 + $0xf0] sm:$0xff]
        %v306 = vld [vmem:[%s284 + $0xf8] sm:$0xff]
        %v307 = vld [vmem:[%s284 + $0x108] sm:$0xff]
        %v308 = vld [vmem:[%s284 + $0x110] sm:$0xff]
        %v309 = vld [vmem:[%s284 + $0x120] sm:$0xff]
        %v310 = vld [vmem:[%s284 + $0x128] sm:$0xff]
        %v311 = vld [vmem:[%s284 + $0x138] sm:$0xff]
        %v312 = vld [vmem:[%s284 + $0x140] sm:$0xff]
        %v313 = vld [vmem:[%s284 + $0x150] sm:$0xff]
        %v314 = vld [vmem:[%s284 + $0x158] sm:$0xff]
        %v315 = vld [vmem:[%s284 + $0x168] sm:$0xff]
        %v316 = vld [vmem:[%s284 + $0x170] sm:$0xff]
        %v317 = vld [vmem:[%s284 + $0x1] sm:$0xff]
        %v318 = vld [vmem:[%s284 + $0x9] sm:$0xff]
        %v319 = vld [vmem:[%s284 + $0x19] sm:$0xff]
        %v320 = vld [vmem:[%s284 + $0x21] sm:$0xff]
        %v321 = vld [vmem:[%s284 + $0x31] sm:$0xff]
        %v322 = vld [vmem:[%s284 + $0x39] sm:$0xff]
        %v323 = vld [vmem:[%s284 + $0x49] sm:$0xff]
        %v324 = vld [vmem:[%s284 + $0x51] sm:$0xff]
        %v325 = vld [vmem:[%s284 + $0x61] sm:$0xff]
        %v326 = vld [vmem:[%s284 + $0x69] sm:$0xff]
        %v327 = vld [vmem:[%s284 + $0x79] sm:$0xff]
        %v328 = vld [vmem:[%s284 + $0x81] sm:$0xff]
        %v329 = vld [vmem:[%s284 + $0x91] sm:$0xff]
        %v330 = vld [vmem:[%s284 + $0x99] sm:$0xff]
        %v331 = vld [vmem:[%s284 + $0xa9] sm:$0xff]
        %v332 = vld [vmem:[%s284 + $0xb1] sm:$0xff]
        %v333 = vld [vmem:[%s284 + $0xc1] sm:$0xff]
        %v334 = vld [vmem:[%s284 + $0xc9] sm:$0xff]
        %v335 = vld [vmem:[%s284 + $0xd9] sm:$0xff]
        %v336 = vld [vmem:[%s284 + $0xe1] sm:$0xff]
        %v337 = vld [vmem:[%s284 + $0xf1] sm:$0xff]
        %v338 = vld [vmem:[%s284 + $0xf9] sm:$0xff]
        %v339 = vld [vmem:[%s284 + $0x109] sm:$0xff]
        %v340 = vld [vmem:[%s284 + $0x111] sm:$0xff]
        %v341 = vld [vmem:[%s284 + $0x121] sm:$0xff]
        %v342 = vld [vmem:[%s284 + $0x129] sm:$0xff]
        %v343 = vld [vmem:[%s284 + $0x139] sm:$0xff]
        %v344 = vld [vmem:[%s284 + $0x141] sm:$0xff]
        %v345 = vld [vmem:[%s284 + $0x151] sm:$0xff]
        %v346 = vld [vmem:[%s284 + $0x159] sm:$0xff]
        %v347 = vld [vmem:[%s284 + $0x169] sm:$0xff]
        %v348 = vld [vmem:[%s284 + $0x171] sm:$0xff]
        %v349 = vld [vmem:[%s284 + $0x2] sm:$0xff]
        %v350 = vld [vmem:[%s284 + $0xa] sm:$0xff]
        %v351 = vld [vmem:[%s284 + $0x1a] sm:$0xff]
        %v352 = vld [vmem:[%s284 + $0x22] sm:$0xff]
        %v353 = vld [vmem:[%s284 + $0x32] sm:$0xff]
        %v354 = vld [vmem:[%s284 + $0x3a] sm:$0xff]
        %v355 = vld [vmem:[%s284 + $0x4a] sm:$0xff]
        %v356 = vld [vmem:[%s284 + $0x52] sm:$0xff]
        %v357 = vld [vmem:[%s284 + $0x62] sm:$0xff]
        %v358 = vld [vmem:[%s284 + $0x6a] sm:$0xff]
        %v359 = vld [vmem:[%s284 + $0x7a] sm:$0xff]
        %v360 = vld [vmem:[%s284 + $0x82] sm:$0xff]
        %v361 = vld [vmem:[%s284 + $0x92] sm:$0xff]
        %v362 = vld [vmem:[%s284 + $0x9a] sm:$0xff]
        %v363 = vld [vmem:[%s284 + $0xaa] sm:$0xff]
        %v364 = vld [vmem:[%s284 + $0xb2] sm:$0xff]
        %v365 = vld [vmem:[%s284 + $0xc2] sm:$0xff]
        %v366 = vld [vmem:[%s284 + $0xca] sm:$0xff]
        %v367 = vld [vmem:[%s284 + $0xda] sm:$0xff]
        %v368 = vld [vmem:[%s284 + $0xe2] sm:$0xff]
        %v369 = vld [vmem:[%s284 + $0xf2] sm:$0xff]
        %v370 = vld [vmem:[%s284 + $0xfa] sm:$0xff]
        %v371 = vld [vmem:[%s284 + $0x10a] sm:$0xff]
        %v372 = vld [vmem:[%s284 + $0x112] sm:$0xff]
        %v373 = vld [vmem:[%s284 + $0x122] sm:$0xff]
        %v374 = vld [vmem:[%s284 + $0x12a] sm:$0xff]
        %v375 = vld [vmem:[%s284 + $0x13a] sm:$0xff]
        %v376 = vld [vmem:[%s284 + $0x142] sm:$0xff]
        %v377 = vld [vmem:[%s284 + $0x152] sm:$0xff]
        %v378 = vld [vmem:[%s284 + $0x15a] sm:$0xff]
        %v379 = vld [vmem:[%s284 + $0x16a] sm:$0xff]
        %v380 = vld [vmem:[%s284 + $0x172] sm:$0xff]
        %s381 = sadd.s32 %s183, 2
        %s382 = smul.u32 %s381, 24
        %s383 = scalar_lea.vmem %s177, %s382
        %v384 = vld [vmem:[%s383] sm:$0xff]
        %v385 = vld [vmem:[%s383 + $0x8] sm:$0xff]
        %v386 = vld [vmem:[%s383 + $0x18] sm:$0xff]
        %v387 = vld [vmem:[%s383 + $0x20] sm:$0xff]
        %v388 = vld [vmem:[%s383 + $0x30] sm:$0xff]
        %v389 = vld [vmem:[%s383 + $0x38] sm:$0xff]
        %v390 = vld [vmem:[%s383 + $0x48] sm:$0xff]
        %v391 = vld [vmem:[%s383 + $0x50] sm:$0xff]
        %v392 = vld [vmem:[%s383 + $0x60] sm:$0xff]
        %v393 = vld [vmem:[%s383 + $0x68] sm:$0xff]
        %v394 = vld [vmem:[%s383 + $0x78] sm:$0xff]
        %v395 = vld [vmem:[%s383 + $0x80] sm:$0xff]
        %v396 = vld [vmem:[%s383 + $0x90] sm:$0xff]
        %v397 = vld [vmem:[%s383 + $0x98] sm:$0xff]
        %v398 = vld [vmem:[%s383 + $0xa8] sm:$0xff]
        %v399 = vld [vmem:[%s383 + $0xb0] sm:$0xff]
        %v400 = vld [vmem:[%s383 + $0xc0] sm:$0xff]
        %v401 = vld [vmem:[%s383 + $0xc8] sm:$0xff]
        %v402 = vld [vmem:[%s383 + $0xd8] sm:$0xff]
        %v403 = vld [vmem:[%s383 + $0xe0] sm:$0xff]
        %v404 = vld [vmem:[%s383 + $0xf0] sm:$0xff]
        %v405 = vld [vmem:[%s383 + $0xf8] sm:$0xff]
        %v406 = vld [vmem:[%s383 + $0x108] sm:$0xff]
        %v407 = vld [vmem:[%s383 + $0x110] sm:$0xff]
        %v408 = vld [vmem:[%s383 + $0x120] sm:$0xff]
        %v409 = vld [vmem:[%s383 + $0x128] sm:$0xff]
        %v410 = vld [vmem:[%s383 + $0x138] sm:$0xff]
        %v411 = vld [vmem:[%s383 + $0x140] sm:$0xff]
        %v412 = vld [vmem:[%s383 + $0x150] sm:$0xff]
        %v413 = vld [vmem:[%s383 + $0x158] sm:$0xff]
        %v414 = vld [vmem:[%s383 + $0x168] sm:$0xff]
        %v415 = vld [vmem:[%s383 + $0x170] sm:$0xff]
        %v416 = vld [vmem:[%s383 + $0x1] sm:$0xff]
        %v417 = vld [vmem:[%s383 + $0x9] sm:$0xff]
        %v418 = vld [vmem:[%s383 + $0x19] sm:$0xff]
        %v419 = vld [vmem:[%s383 + $0x21] sm:$0xff]
        %v420 = vld [vmem:[%s383 + $0x31] sm:$0xff]
        %v421 = vld [vmem:[%s383 + $0x39] sm:$0xff]
        %v422 = vld [vmem:[%s383 + $0x49] sm:$0xff]
        %v423 = vld [vmem:[%s383 + $0x51] sm:$0xff]
        %v424 = vld [vmem:[%s383 + $0x61] sm:$0xff]
        %v425 = vld [vmem:[%s383 + $0x69] sm:$0xff]
        %v426 = vld [vmem:[%s383 + $0x79] sm:$0xff]
        %v427 = vld [vmem:[%s383 + $0x81] sm:$0xff]
        %v428 = vld [vmem:[%s383 + $0x91] sm:$0xff]
        %v429 = vld [vmem:[%s383 + $0x99] sm:$0xff]
        %v430 = vld [vmem:[%s383 + $0xa9] sm:$0xff]
        %v431 = vld [vmem:[%s383 + $0xb1] sm:$0xff]
        %v432 = vld [vmem:[%s383 + $0xc1] sm:$0xff]
        %v433 = vld [vmem:[%s383 + $0xc9] sm:$0xff]
        %v434 = vld [vmem:[%s383 + $0xd9] sm:$0xff]
        %v435 = vld [vmem:[%s383 + $0xe1] sm:$0xff]
        %v436 = vld [vmem:[%s383 + $0xf1] sm:$0xff]
        %v437 = vld [vmem:[%s383 + $0xf9] sm:$0xff]
        %v438 = vld [vmem:[%s383 + $0x109] sm:$0xff]
        %v439 = vld [vmem:[%s383 + $0x111] sm:$0xff]
        %v440 = vld [vmem:[%s383 + $0x121] sm:$0xff]
        %v441 = vld [vmem:[%s383 + $0x129] sm:$0xff]
        %v442 = vld [vmem:[%s383 + $0x139] sm:$0xff]
        %v443 = vld [vmem:[%s383 + $0x141] sm:$0xff]
        %v444 = vld [vmem:[%s383 + $0x151] sm:$0xff]
        %v445 = vld [vmem:[%s383 + $0x159] sm:$0xff]
        %v446 = vld [vmem:[%s383 + $0x169] sm:$0xff]
        %v447 = vld [vmem:[%s383 + $0x171] sm:$0xff]
        %v448 = vld [vmem:[%s383 + $0x2] sm:$0xff]
        %v449 = vld [vmem:[%s383 + $0xa] sm:$0xff]
        %v450 = vld [vmem:[%s383 + $0x1a] sm:$0xff]
        %v451 = vld [vmem:[%s383 + $0x22] sm:$0xff]
        %v452 = vld [vmem:[%s383 + $0x32] sm:$0xff]
        %v453 = vld [vmem:[%s383 + $0x3a] sm:$0xff]
        %v454 = vld [vmem:[%s383 + $0x4a] sm:$0xff]
        %v455 = vld [vmem:[%s383 + $0x52] sm:$0xff]
        %v456 = vld [vmem:[%s383 + $0x62] sm:$0xff]
        %v457 = vld [vmem:[%s383 + $0x6a] sm:$0xff]
        %v458 = vld [vmem:[%s383 + $0x7a] sm:$0xff]
        %v459 = vld [vmem:[%s383 + $0x82] sm:$0xff]
        %v460 = vld [vmem:[%s383 + $0x92] sm:$0xff]
        %v461 = vld [vmem:[%s383 + $0x9a] sm:$0xff]
        %v462 = vld [vmem:[%s383 + $0xaa] sm:$0xff]
        %v463 = vld [vmem:[%s383 + $0xb2] sm:$0xff]
        %v464 = vld [vmem:[%s383 + $0xc2] sm:$0xff]
        %v465 = vld [vmem:[%s383 + $0xca] sm:$0xff]
        %v466 = vld [vmem:[%s383 + $0xda] sm:$0xff]
        %v467 = vld [vmem:[%s383 + $0xe2] sm:$0xff]
        %v468 = vld [vmem:[%s383 + $0xf2] sm:$0xff]
        %v469 = vld [vmem:[%s383 + $0xfa] sm:$0xff]
        %v470 = vld [vmem:[%s383 + $0x10a] sm:$0xff]
        %v471 = vld [vmem:[%s383 + $0x112] sm:$0xff]
        %v472 = vld [vmem:[%s383 + $0x122] sm:$0xff]
        %v473 = vld [vmem:[%s383 + $0x12a] sm:$0xff]
        %v474 = vld [vmem:[%s383 + $0x13a] sm:$0xff]
        %v475 = vld [vmem:[%s383 + $0x142] sm:$0xff]
        %v476 = vld [vmem:[%s383 + $0x152] sm:$0xff]
        %v477 = vld [vmem:[%s383 + $0x15a] sm:$0xff]
        %v478 = vld [vmem:[%s383 + $0x16a] sm:$0xff]
        %v479 = vld [vmem:[%s383 + $0x172] sm:$0xff]
        %512 = vrot.lane.b32.xlu0 %v218, 4
        %v513 = vpop.permute.xlu0 %512
        %514 = vrot.lane.b32.xlu0 %v219, 4
        %v515 = vpop.permute.xlu0 %514
        %516 = vrot.lane.b32.xlu0 %v220, 4
        %v517 = vpop.permute.xlu0 %516
        %518 = vrot.lane.b32.xlu0 %v221, 4
        %v519 = vpop.permute.xlu0 %518
        %520 = vrot.lane.b32.xlu0 %v222, 4
        %v521 = vpop.permute.xlu0 %520
        %522 = vrot.lane.b32.xlu0 %v223, 4
        %v523 = vpop.permute.xlu0 %522
        %524 = vrot.lane.b32.xlu0 %v224, 4
        %v525 = vpop.permute.xlu0 %524
        %526 = vrot.lane.b32.xlu0 %v225, 4
        %v527 = vpop.permute.xlu0 %526
        %528 = vrot.lane.b32.xlu0 %v226, 4
        %v529 = vpop.permute.xlu0 %528
        %530 = vrot.lane.b32.xlu0 %v227, 4
        %v531 = vpop.permute.xlu0 %530
        %532 = vrot.lane.b32.xlu0 %v228, 4
        %v533 = vpop.permute.xlu0 %532
        %534 = vrot.lane.b32.xlu0 %v229, 4
        %v535 = vpop.permute.xlu0 %534
        %536 = vrot.lane.b32.xlu0 %v230, 4
        %v537 = vpop.permute.xlu0 %536
        %538 = vrot.lane.b32.xlu0 %v231, 4
        %v539 = vpop.permute.xlu0 %538
        %540 = vrot.lane.b32.xlu0 %v232, 4
        %v541 = vpop.permute.xlu0 %540
        %542 = vrot.lane.b32.xlu0 %v233, 4
        %v543 = vpop.permute.xlu0 %542
        %544 = vrot.lane.b32.xlu0 %v234, 4
        %v545 = vpop.permute.xlu0 %544
        %546 = vrot.lane.b32.xlu0 %v235, 4
        %v547 = vpop.permute.xlu0 %546
        %548 = vrot.lane.b32.xlu0 %v236, 4
        %v549 = vpop.permute.xlu0 %548
        %550 = vrot.lane.b32.xlu0 %v237, 4
        %v551 = vpop.permute.xlu0 %550
        %552 = vrot.lane.b32.xlu0 %v238, 4
        %v553 = vpop.permute.xlu0 %552
        %554 = vrot.lane.b32.xlu0 %v239, 4
        %v555 = vpop.permute.xlu0 %554
        %556 = vrot.lane.b32.xlu0 %v240, 4
        %v557 = vpop.permute.xlu0 %556
        %558 = vrot.lane.b32.xlu0 %v241, 4
        %v559 = vpop.permute.xlu0 %558
        %560 = vrot.lane.b32.xlu0 %v242, 4
        %v561 = vpop.permute.xlu0 %560
        %562 = vrot.lane.b32.xlu0 %v243, 4
        %v563 = vpop.permute.xlu0 %562
        %564 = vrot.lane.b32.xlu0 %v244, 4
        %v565 = vpop.permute.xlu0 %564
        %566 = vrot.lane.b32.xlu0 %v245, 4
        %v567 = vpop.permute.xlu0 %566
        %568 = vrot.lane.b32.xlu0 %v246, 4
        %v569 = vpop.permute.xlu0 %568
        %570 = vrot.lane.b32.xlu0 %v247, 4
        %v571 = vpop.permute.xlu0 %570
        %572 = vrot.lane.b32.xlu0 %v248, 4
        %v573 = vpop.permute.xlu0 %572
        %574 = vrot.lane.b32.xlu0 %v249, 4
        %v575 = vpop.permute.xlu0 %574
        %640 = vrot.lane.b32.xlu0 %v250, 8
        %v641 = vpop.permute.xlu0 %640
        %642 = vrot.lane.b32.xlu0 %v251, 8
        %v643 = vpop.permute.xlu0 %642
        %644 = vrot.lane.b32.xlu0 %v252, 8
        %v645 = vpop.permute.xlu0 %644
        %646 = vrot.lane.b32.xlu0 %v253, 8
        %v647 = vpop.permute.xlu0 %646
        %648 = vrot.lane.b32.xlu0 %v254, 8
        %v649 = vpop.permute.xlu0 %648
        %650 = vrot.lane.b32.xlu0 %v255, 8
        %v651 = vpop.permute.xlu0 %650
        %652 = vrot.lane.b32.xlu0 %v256, 8
        %v653 = vpop.permute.xlu0 %652
        %654 = vrot.lane.b32.xlu0 %v257, 8
        %v655 = vpop.permute.xlu0 %654
        %656 = vrot.lane.b32.xlu0 %v258, 8
        %v657 = vpop.permute.xlu0 %656
        %658 = vrot.lane.b32.xlu0 %v259, 8
        %v659 = vpop.permute.xlu0 %658
        %660 = vrot.lane.b32.xlu0 %v260, 8
        %v661 = vpop.permute.xlu0 %660
        %662 = vrot.lane.b32.xlu0 %v261, 8
        %v663 = vpop.permute.xlu0 %662
        %664 = vrot.lane.b32.xlu0 %v262, 8
        %v665 = vpop.permute.xlu0 %664
        %666 = vrot.lane.b32.xlu0 %v263, 8
        %v667 = vpop.permute.xlu0 %666
        %668 = vrot.lane.b32.xlu0 %v264, 8
        %v669 = vpop.permute.xlu0 %668
        %670 = vrot.lane.b32.xlu0 %v265, 8
        %v671 = vpop.permute.xlu0 %670
        %672 = vrot.lane.b32.xlu0 %v266, 8
        %v673 = vpop.permute.xlu0 %672
        %674 = vrot.lane.b32.xlu0 %v267, 8
        %v675 = vpop.permute.xlu0 %674
        %676 = vrot.lane.b32.xlu0 %v268, 8
        %v677 = vpop.permute.xlu0 %676
        %678 = vrot.lane.b32.xlu0 %v269, 8
        %v679 = vpop.permute.xlu0 %678
        %680 = vrot.lane.b32.xlu0 %v270, 8
        %v681 = vpop.permute.xlu0 %680
        %682 = vrot.lane.b32.xlu0 %v271, 8
        %v683 = vpop.permute.xlu0 %682
        %684 = vrot.lane.b32.xlu0 %v272, 8
        %v685 = vpop.permute.xlu0 %684
        %686 = vrot.lane.b32.xlu0 %v273, 8
        %v687 = vpop.permute.xlu0 %686
        %688 = vrot.lane.b32.xlu0 %v274, 8
        %v689 = vpop.permute.xlu0 %688
        %690 = vrot.lane.b32.xlu0 %v275, 8
        %v691 = vpop.permute.xlu0 %690
        %692 = vrot.lane.b32.xlu0 %v276, 8
        %v693 = vpop.permute.xlu0 %692
        %694 = vrot.lane.b32.xlu0 %v277, 8
        %v695 = vpop.permute.xlu0 %694
        %696 = vrot.lane.b32.xlu0 %v278, 8
        %v697 = vpop.permute.xlu0 %696
        %698 = vrot.lane.b32.xlu0 %v279, 8
        %v699 = vpop.permute.xlu0 %698
        %700 = vrot.lane.b32.xlu0 %v280, 8
        %v701 = vpop.permute.xlu0 %700
        %702 = vrot.lane.b32.xlu0 %v281, 8
        %v703 = vpop.permute.xlu0 %702
        %768 = vrot.lane.b32.xlu0 %v285, 12
        %v769 = vpop.permute.xlu0 %768
        %770 = vrot.lane.b32.xlu0 %v286, 12
        %v771 = vpop.permute.xlu0 %770
        %772 = vrot.lane.b32.xlu0 %v287, 12
        %v773 = vpop.permute.xlu0 %772
        %774 = vrot.lane.b32.xlu0 %v288, 12
        %v775 = vpop.permute.xlu0 %774
        %776 = vrot.lane.b32.xlu0 %v289, 12
        %v777 = vpop.permute.xlu0 %776
        %778 = vrot.lane.b32.xlu0 %v290, 12
        %v779 = vpop.permute.xlu0 %778
        %780 = vrot.lane.b32.xlu0 %v291, 12
        %v781 = vpop.permute.xlu0 %780
        %782 = vrot.lane.b32.xlu0 %v292, 12
        %v783 = vpop.permute.xlu0 %782
        %784 = vrot.lane.b32.xlu0 %v293, 12
        %v785 = vpop.permute.xlu0 %784
        %786 = vrot.lane.b32.xlu0 %v294, 12
        %v787 = vpop.permute.xlu0 %786
        %788 = vrot.lane.b32.xlu0 %v295, 12
        %v789 = vpop.permute.xlu0 %788
        %790 = vrot.lane.b32.xlu0 %v296, 12
        %v791 = vpop.permute.xlu0 %790
        %792 = vrot.lane.b32.xlu0 %v297, 12
        %v793 = vpop.permute.xlu0 %792
        %794 = vrot.lane.b32.xlu0 %v298, 12
        %v795 = vpop.permute.xlu0 %794
        %796 = vrot.lane.b32.xlu0 %v299, 12
        %v797 = vpop.permute.xlu0 %796
        %798 = vrot.lane.b32.xlu0 %v300, 12
        %v799 = vpop.permute.xlu0 %798
        %800 = vrot.lane.b32.xlu0 %v301, 12
        %v801 = vpop.permute.xlu0 %800
        %802 = vrot.lane.b32.xlu0 %v302, 12
        %v803 = vpop.permute.xlu0 %802
        %804 = vrot.lane.b32.xlu0 %v303, 12
        %v805 = vpop.permute.xlu0 %804
        %806 = vrot.lane.b32.xlu0 %v304, 12
        %v807 = vpop.permute.xlu0 %806
        %808 = vrot.lane.b32.xlu0 %v305, 12
        %v809 = vpop.permute.xlu0 %808
        %810 = vrot.lane.b32.xlu0 %v306, 12
        %v811 = vpop.permute.xlu0 %810
        %812 = vrot.lane.b32.xlu0 %v307, 12
        %v813 = vpop.permute.xlu0 %812
        %814 = vrot.lane.b32.xlu0 %v308, 12
        %v815 = vpop.permute.xlu0 %814
        %816 = vrot.lane.b32.xlu0 %v309, 12
        %v817 = vpop.permute.xlu0 %816
        %818 = vrot.lane.b32.xlu0 %v310, 12
        %v819 = vpop.permute.xlu0 %818
        %820 = vrot.lane.b32.xlu0 %v311, 12
        %v821 = vpop.permute.xlu0 %820
        %822 = vrot.lane.b32.xlu0 %v312, 12
        %v823 = vpop.permute.xlu0 %822
        %824 = vrot.lane.b32.xlu0 %v313, 12
        %v825 = vpop.permute.xlu0 %824
        %826 = vrot.lane.b32.xlu0 %v314, 12
        %v827 = vpop.permute.xlu0 %826
        %828 = vrot.lane.b32.xlu0 %v315, 12
        %v829 = vpop.permute.xlu0 %828
        %830 = vrot.lane.b32.xlu0 %v316, 12
        %v831 = vpop.permute.xlu0 %830
        %896 = vrot.lane.b32.xlu0 %v317, 16
        %v897 = vpop.permute.xlu0 %896
        %898 = vrot.lane.b32.xlu0 %v318, 16
        %v899 = vpop.permute.xlu0 %898
        %900 = vrot.lane.b32.xlu0 %v319, 16
        %v901 = vpop.permute.xlu0 %900
        %902 = vrot.lane.b32.xlu0 %v320, 16
        %v903 = vpop.permute.xlu0 %902
        %904 = vrot.lane.b32.xlu0 %v321, 16
        %v905 = vpop.permute.xlu0 %904
        %906 = vrot.lane.b32.xlu0 %v322, 16
        %v907 = vpop.permute.xlu0 %906
        %908 = vrot.lane.b32.xlu0 %v323, 16
        %v909 = vpop.permute.xlu0 %908
        %910 = vrot.lane.b32.xlu0 %v324, 16
        %v911 = vpop.permute.xlu0 %910
        %912 = vrot.lane.b32.xlu0 %v325, 16
        %v913 = vpop.permute.xlu0 %912
        %914 = vrot.lane.b32.xlu0 %v326, 16
        %v915 = vpop.permute.xlu0 %914
        %916 = vrot.lane.b32.xlu0 %v327, 16
        %v917 = vpop.permute.xlu0 %916
        %918 = vrot.lane.b32.xlu0 %v328, 16
        %v919 = vpop.permute.xlu0 %918
        %920 = vrot.lane.b32.xlu0 %v329, 16
        %v921 = vpop.permute.xlu0 %920
        %922 = vrot.lane.b32.xlu0 %v330, 16
        %v923 = vpop.permute.xlu0 %922
        %924 = vrot.lane.b32.xlu0 %v331, 16
        %v925 = vpop.permute.xlu0 %924
        %926 = vrot.lane.b32.xlu0 %v332, 16
        %v927 = vpop.permute.xlu0 %926
        %928 = vrot.lane.b32.xlu0 %v333, 16
        %v929 = vpop.permute.xlu0 %928
        %930 = vrot.lane.b32.xlu0 %v334, 16
        %v931 = vpop.permute.xlu0 %930
        %932 = vrot.lane.b32.xlu0 %v335, 16
        %v933 = vpop.permute.xlu0 %932
        %934 = vrot.lane.b32.xlu0 %v336, 16
        %v935 = vpop.permute.xlu0 %934
        %936 = vrot.lane.b32.xlu0 %v337, 16
        %v937 = vpop.permute.xlu0 %936
        %938 = vrot.lane.b32.xlu0 %v338, 16
        %v939 = vpop.permute.xlu0 %938
        %940 = vrot.lane.b32.xlu0 %v339, 16
        %v941 = vpop.permute.xlu0 %940
        %942 = vrot.lane.b32.xlu0 %v340, 16
        %v943 = vpop.permute.xlu0 %942
        %944 = vrot.lane.b32.xlu0 %v341, 16
        %v945 = vpop.permute.xlu0 %944
        %946 = vrot.lane.b32.xlu0 %v342, 16
        %v947 = vpop.permute.xlu0 %946
        %948 = vrot.lane.b32.xlu0 %v343, 16
        %v949 = vpop.permute.xlu0 %948
        %950 = vrot.lane.b32.xlu0 %v344, 16
        %v951 = vpop.permute.xlu0 %950
        %952 = vrot.lane.b32.xlu0 %v345, 16
        %v953 = vpop.permute.xlu0 %952
        %954 = vrot.lane.b32.xlu0 %v346, 16
        %v955 = vpop.permute.xlu0 %954
        %956 = vrot.lane.b32.xlu0 %v347, 16
        %v957 = vpop.permute.xlu0 %956
        %958 = vrot.lane.b32.xlu0 %v348, 16
        %v959 = vpop.permute.xlu0 %958
        %1024 = vrot.lane.b32.xlu0 %v349, 20
        %v1025 = vpop.permute.xlu0 %1024
        %1026 = vrot.lane.b32.xlu0 %v350, 20
        %v1027 = vpop.permute.xlu0 %1026
        %1028 = vrot.lane.b32.xlu0 %v351, 20
        %v1029 = vpop.permute.xlu0 %1028
        %1030 = vrot.lane.b32.xlu0 %v352, 20
        %v1031 = vpop.permute.xlu0 %1030
        %1032 = vrot.lane.b32.xlu0 %v353, 20
        %v1033 = vpop.permute.xlu0 %1032
        %1034 = vrot.lane.b32.xlu0 %v354, 20
        %v1035 = vpop.permute.xlu0 %1034
        %1036 = vrot.lane.b32.xlu0 %v355, 20
        %v1037 = vpop.permute.xlu0 %1036
        %1038 = vrot.lane.b32.xlu0 %v356, 20
        %v1039 = vpop.permute.xlu0 %1038
        %1040 = vrot.lane.b32.xlu0 %v357, 20
        %v1041 = vpop.permute.xlu0 %1040
        %1042 = vrot.lane.b32.xlu0 %v358, 20
        %v1043 = vpop.permute.xlu0 %1042
        %1044 = vrot.lane.b32.xlu0 %v359, 20
        %v1045 = vpop.permute.xlu0 %1044
        %1046 = vrot.lane.b32.xlu0 %v360, 20
        %v1047 = vpop.permute.xlu0 %1046
        %1048 = vrot.lane.b32.xlu0 %v361, 20
        %v1049 = vpop.permute.xlu0 %1048
        %1050 = vrot.lane.b32.xlu0 %v362, 20
        %v1051 = vpop.permute.xlu0 %1050
        %1052 = vrot.lane.b32.xlu0 %v363, 20
        %v1053 = vpop.permute.xlu0 %1052
        %1054 = vrot.lane.b32.xlu0 %v364, 20
        %v1055 = vpop.permute.xlu0 %1054
        %1056 = vrot.lane.b32.xlu0 %v365, 20
        %v1057 = vpop.permute.xlu0 %1056
        %1058 = vrot.lane.b32.xlu0 %v366, 20
        %v1059 = vpop.permute.xlu0 %1058
        %1060 = vrot.lane.b32.xlu0 %v367, 20
        %v1061 = vpop.permute.xlu0 %1060
        %1062 = vrot.lane.b32.xlu0 %v368, 20
        %v1063 = vpop.permute.xlu0 %1062
        %1064 = vrot.lane.b32.xlu0 %v369, 20
        %v1065 = vpop.permute.xlu0 %1064
        %1066 = vrot.lane.b32.xlu0 %v370, 20
        %v1067 = vpop.permute.xlu0 %1066
        %1068 = vrot.lane.b32.xlu0 %v371, 20
        %v1069 = vpop.permute.xlu0 %1068
        %1070 = vrot.lane.b32.xlu0 %v372, 20
        %v1071 = vpop.permute.xlu0 %1070
        %1072 = vrot.lane.b32.xlu0 %v373, 20
        %v1073 = vpop.permute.xlu0 %1072
        %1074 = vrot.lane.b32.xlu0 %v374, 20
        %v1075 = vpop.permute.xlu0 %1074
        %1076 = vrot.lane.b32.xlu0 %v375, 20
        %v1077 = vpop.permute.xlu0 %1076
        %1078 = vrot.lane.b32.xlu0 %v376, 20
        %v1079 = vpop.permute.xlu0 %1078
        %1080 = vrot.lane.b32.xlu0 %v377, 20
        %v1081 = vpop.permute.xlu0 %1080
        %1082 = vrot.lane.b32.xlu0 %v378, 20
        %v1083 = vpop.permute.xlu0 %1082
        %1084 = vrot.lane.b32.xlu0 %v379, 20
        %v1085 = vpop.permute.xlu0 %1084
        %1086 = vrot.lane.b32.xlu0 %v380, 20
        %v1087 = vpop.permute.xlu0 %1086
        %1152 = vrot.lane.b32.xlu0 %v384, 24
        %v1153 = vpop.permute.xlu0 %1152
        %1154 = vrot.lane.b32.xlu0 %v385, 24
        %v1155 = vpop.permute.xlu0 %1154
        %1156 = vrot.lane.b32.xlu0 %v386, 24
        %v1157 = vpop.permute.xlu0 %1156
        %1158 = vrot.lane.b32.xlu0 %v387, 24
        %v1159 = vpop.permute.xlu0 %1158
        %1160 = vrot.lane.b32.xlu0 %v388, 24
        %v1161 = vpop.permute.xlu0 %1160
        %1162 = vrot.lane.b32.xlu0 %v389, 24
        %v1163 = vpop.permute.xlu0 %1162
        %1164 = vrot.lane.b32.xlu0 %v390, 24
        %v1165 = vpop.permute.xlu0 %1164
        %1166 = vrot.lane.b32.xlu0 %v391, 24
        %v1167 = vpop.permute.xlu0 %1166
        %1168 = vrot.lane.b32.xlu0 %v392, 24
        %v1169 = vpop.permute.xlu0 %1168
        %1170 = vrot.lane.b32.xlu0 %v393, 24
        %v1171 = vpop.permute.xlu0 %1170
        %1172 = vrot.lane.b32.xlu0 %v394, 24
        %v1173 = vpop.permute.xlu0 %1172
        %1174 = vrot.lane.b32.xlu0 %v395, 24
        %v1175 = vpop.permute.xlu0 %1174
        %1176 = vrot.lane.b32.xlu0 %v396, 24
        %v1177 = vpop.permute.xlu0 %1176
        %1178 = vrot.lane.b32.xlu0 %v397, 24
        %v1179 = vpop.permute.xlu0 %1178
        %1180 = vrot.lane.b32.xlu0 %v398, 24
        %v1181 = vpop.permute.xlu0 %1180
        %1182 = vrot.lane.b32.xlu0 %v399, 24
        %v1183 = vpop.permute.xlu0 %1182
        %1184 = vrot.lane.b32.xlu0 %v400, 24
        %v1185 = vpop.permute.xlu0 %1184
        %1186 = vrot.lane.b32.xlu0 %v401, 24
        %v1187 = vpop.permute.xlu0 %1186
        %1188 = vrot.lane.b32.xlu0 %v402, 24
        %v1189 = vpop.permute.xlu0 %1188
        %1190 = vrot.lane.b32.xlu0 %v403, 24
        %v1191 = vpop.permute.xlu0 %1190
        %1192 = vrot.lane.b32.xlu0 %v404, 24
        %v1193 = vpop.permute.xlu0 %1192
        %1194 = vrot.lane.b32.xlu0 %v405, 24
        %v1195 = vpop.permute.xlu0 %1194
        %1196 = vrot.lane.b32.xlu0 %v406, 24
        %v1197 = vpop.permute.xlu0 %1196
        %1198 = vrot.lane.b32.xlu0 %v407, 24
        %v1199 = vpop.permute.xlu0 %1198
        %1200 = vrot.lane.b32.xlu0 %v408, 24
        %v1201 = vpop.permute.xlu0 %1200
        %1202 = vrot.lane.b32.xlu0 %v409, 24
        %v1203 = vpop.permute.xlu0 %1202
        %1204 = vrot.lane.b32.xlu0 %v410, 24
        %v1205 = vpop.permute.xlu0 %1204
        %1206 = vrot.lane.b32.xlu0 %v411, 24
        %v1207 = vpop.permute.xlu0 %1206
        %1208 = vrot.lane.b32.xlu0 %v412, 24
        %v1209 = vpop.permute.xlu0 %1208
        %1210 = vrot.lane.b32.xlu0 %v413, 24
        %v1211 = vpop.permute.xlu0 %1210
        %1212 = vrot.lane.b32.xlu0 %v414, 24
        %v1213 = vpop.permute.xlu0 %1212
        %1214 = vrot.lane.b32.xlu0 %v415, 24
        %v1215 = vpop.permute.xlu0 %1214
        %1280 = vrot.lane.b32.xlu0 %v416, 28
        %v1281 = vpop.permute.xlu0 %1280
        %1282 = vrot.lane.b32.xlu0 %v417, 28
        %v1283 = vpop.permute.xlu0 %1282
        %1284 = vrot.lane.b32.xlu0 %v418, 28
        %v1285 = vpop.permute.xlu0 %1284
        %1286 = vrot.lane.b32.xlu0 %v419, 28
        %v1287 = vpop.permute.xlu0 %1286
        %1288 = vrot.lane.b32.xlu0 %v420, 28
        %v1289 = vpop.permute.xlu0 %1288
        %1290 = vrot.lane.b32.xlu0 %v421, 28
        %v1291 = vpop.permute.xlu0 %1290
        %1292 = vrot.lane.b32.xlu0 %v422, 28
        %v1293 = vpop.permute.xlu0 %1292
        %1294 = vrot.lane.b32.xlu0 %v423, 28
        %v1295 = vpop.permute.xlu0 %1294
        %1296 = vrot.lane.b32.xlu0 %v424, 28
        %v1297 = vpop.permute.xlu0 %1296
        %1298 = vrot.lane.b32.xlu0 %v425, 28
        %v1299 = vpop.permute.xlu0 %1298
        %1300 = vrot.lane.b32.xlu0 %v426, 28
        %v1301 = vpop.permute.xlu0 %1300
        %1302 = vrot.lane.b32.xlu0 %v427, 28
        %v1303 = vpop.permute.xlu0 %1302
        %1304 = vrot.lane.b32.xlu0 %v428, 28
        %v1305 = vpop.permute.xlu0 %1304
        %1306 = vrot.lane.b32.xlu0 %v429, 28
        %v1307 = vpop.permute.xlu0 %1306
        %1308 = vrot.lane.b32.xlu0 %v430, 28
        %v1309 = vpop.permute.xlu0 %1308
        %1310 = vrot.lane.b32.xlu0 %v431, 28
        %v1311 = vpop.permute.xlu0 %1310
        %1312 = vrot.lane.b32.xlu0 %v432, 28
        %v1313 = vpop.permute.xlu0 %1312
        %1314 = vrot.lane.b32.xlu0 %v433, 28
        %v1315 = vpop.permute.xlu0 %1314
        %1316 = vrot.lane.b32.xlu0 %v434, 28
        %v1317 = vpop.permute.xlu0 %1316
        %1318 = vrot.lane.b32.xlu0 %v435, 28
        %v1319 = vpop.permute.xlu0 %1318
        %1320 = vrot.lane.b32.xlu0 %v436, 28
        %v1321 = vpop.permute.xlu0 %1320
        %1322 = vrot.lane.b32.xlu0 %v437, 28
        %v1323 = vpop.permute.xlu0 %1322
        %1324 = vrot.lane.b32.xlu0 %v438, 28
        %v1325 = vpop.permute.xlu0 %1324
        %1326 = vrot.lane.b32.xlu0 %v439, 28
        %v1327 = vpop.permute.xlu0 %1326
        %1328 = vrot.lane.b32.xlu0 %v440, 28
        %v1329 = vpop.permute.xlu0 %1328
        %1330 = vrot.lane.b32.xlu0 %v441, 28
        %v1331 = vpop.permute.xlu0 %1330
        %1332 = vrot.lane.b32.xlu0 %v442, 28
        %v1333 = vpop.permute.xlu0 %1332
        %1334 = vrot.lane.b32.xlu0 %v443, 28
        %v1335 = vpop.permute.xlu0 %1334
        %1336 = vrot.lane.b32.xlu0 %v444, 28
        %v1337 = vpop.permute.xlu0 %1336
        %1338 = vrot.lane.b32.xlu0 %v445, 28
        %v1339 = vpop.permute.xlu0 %1338
        %1340 = vrot.lane.b32.xlu0 %v446, 28
        %v1341 = vpop.permute.xlu0 %1340
        %1342 = vrot.lane.b32.xlu0 %v447, 28
        %v1343 = vpop.permute.xlu0 %1342
        %1408 = vrot.lane.b32.xlu0 %v448, 32
        %v1409 = vpop.permute.xlu0 %1408
        %1410 = vrot.lane.b32.xlu0 %v449, 32
        %v1411 = vpop.permute.xlu0 %1410
        %1412 = vrot.lane.b32.xlu0 %v450, 32
        %v1413 = vpop.permute.xlu0 %1412
        %1414 = vrot.lane.b32.xlu0 %v451, 32
        %v1415 = vpop.permute.xlu0 %1414
        %1416 = vrot.lane.b32.xlu0 %v452, 32
        %v1417 = vpop.permute.xlu0 %1416
        %1418 = vrot.lane.b32.xlu0 %v453, 32
        %v1419 = vpop.permute.xlu0 %1418
        %1420 = vrot.lane.b32.xlu0 %v454, 32
        %v1421 = vpop.permute.xlu0 %1420
        %1422 = vrot.lane.b32.xlu0 %v455, 32
        %v1423 = vpop.permute.xlu0 %1422
        %1424 = vrot.lane.b32.xlu0 %v456, 32
        %v1425 = vpop.permute.xlu0 %1424
        %1426 = vrot.lane.b32.xlu0 %v457, 32
        %v1427 = vpop.permute.xlu0 %1426
        %1428 = vrot.lane.b32.xlu0 %v458, 32
        %v1429 = vpop.permute.xlu0 %1428
        %1430 = vrot.lane.b32.xlu0 %v459, 32
        %v1431 = vpop.permute.xlu0 %1430
        %1432 = vrot.lane.b32.xlu0 %v460, 32
        %v1433 = vpop.permute.xlu0 %1432
        %1434 = vrot.lane.b32.xlu0 %v461, 32
        %v1435 = vpop.permute.xlu0 %1434
        %1436 = vrot.lane.b32.xlu0 %v462, 32
        %v1437 = vpop.permute.xlu0 %1436
        %1438 = vrot.lane.b32.xlu0 %v463, 32
        %v1439 = vpop.permute.xlu0 %1438
        %1440 = vrot.lane.b32.xlu0 %v464, 32
        %v1441 = vpop.permute.xlu0 %1440
        %1442 = vrot.lane.b32.xlu0 %v465, 32
        %v1443 = vpop.permute.xlu0 %1442
        %1444 = vrot.lane.b32.xlu0 %v466, 32
        %v1445 = vpop.permute.xlu0 %1444
        %1446 = vrot.lane.b32.xlu0 %v467, 32
        %v1447 = vpop.permute.xlu0 %1446
        %1448 = vrot.lane.b32.xlu0 %v468, 32
        %v1449 = vpop.permute.xlu0 %1448
        %1450 = vrot.lane.b32.xlu0 %v469, 32
        %v1451 = vpop.permute.xlu0 %1450
        %1452 = vrot.lane.b32.xlu0 %v470, 32
        %v1453 = vpop.permute.xlu0 %1452
        %1454 = vrot.lane.b32.xlu0 %v471, 32
        %v1455 = vpop.permute.xlu0 %1454
        %1456 = vrot.lane.b32.xlu0 %v472, 32
        %v1457 = vpop.permute.xlu0 %1456
        %1458 = vrot.lane.b32.xlu0 %v473, 32
        %v1459 = vpop.permute.xlu0 %1458
        %1460 = vrot.lane.b32.xlu0 %v474, 32
        %v1461 = vpop.permute.xlu0 %1460
        %1462 = vrot.lane.b32.xlu0 %v475, 32
        %v1463 = vpop.permute.xlu0 %1462
        %1464 = vrot.lane.b32.xlu0 %v476, 32
        %v1465 = vpop.permute.xlu0 %1464
        %1466 = vrot.lane.b32.xlu0 %v477, 32
        %v1467 = vpop.permute.xlu0 %1466
        %1468 = vrot.lane.b32.xlu0 %v478, 32
        %v1469 = vpop.permute.xlu0 %1468
        %1470 = vrot.lane.b32.xlu0 %v479, 32
        %v1471 = vpop.permute.xlu0 %1470
        %vm1504 = vcmask 31744
        %v1505 = vsel %vm1504, %v186, %v513
        %v1506 = vsel %vm1504, %v187, %v515
        %v1507 = vsel %vm1504, %v188, %v517
        %v1508 = vsel %vm1504, %v189, %v519
        %v1509 = vsel %vm1504, %v190, %v521
        %v1510 = vsel %vm1504, %v191, %v523
        %v1511 = vsel %vm1504, %v192, %v525
        %v1512 = vsel %vm1504, %v193, %v527
        %v1513 = vsel %vm1504, %v194, %v529
        %v1514 = vsel %vm1504, %v195, %v531
        %v1515 = vsel %vm1504, %v196, %v533
        %v1516 = vsel %vm1504, %v197, %v535
        %v1517 = vsel %vm1504, %v198, %v537
        %v1518 = vsel %vm1504, %v199, %v539
        %v1519 = vsel %vm1504, %v200, %v541
        %v1520 = vsel %vm1504, %v201, %v543
        %v1521 = vsel %vm1504, %v202, %v545
        %v1522 = vsel %vm1504, %v203, %v547
        %v1523 = vsel %vm1504, %v204, %v549
        %v1524 = vsel %vm1504, %v205, %v551
        %v1525 = vsel %vm1504, %v206, %v553
        %v1526 = vsel %vm1504, %v207, %v555
        %v1527 = vsel %vm1504, %v208, %v557
        %v1528 = vsel %vm1504, %v209, %v559
        %v1529 = vsel %vm1504, %v210, %v561
        %v1530 = vsel %vm1504, %v211, %v563
        %v1531 = vsel %vm1504, %v212, %v565
        %v1532 = vsel %vm1504, %v213, %v567
        %v1533 = vsel %vm1504, %v214, %v569
        %v1534 = vsel %vm1504, %v215, %v571
        %v1535 = vsel %vm1504, %v216, %v573
        %v1536 = vsel %vm1504, %v217, %v575
        %vm1537 = vcmask 64512
        %v1538 = vsel %vm1537, %v1505, %v641
        %v1539 = vsel %vm1537, %v1506, %v643
        %v1540 = vsel %vm1537, %v1507, %v645
        %v1541 = vsel %vm1537, %v1508, %v647
        %v1542 = vsel %vm1537, %v1509, %v649
        %v1543 = vsel %vm1537, %v1510, %v651
        %v1544 = vsel %vm1537, %v1511, %v653
        %v1545 = vsel %vm1537, %v1512, %v655
        %v1546 = vsel %vm1537, %v1513, %v657
        %v1547 = vsel %vm1537, %v1514, %v659
        %v1548 = vsel %vm1537, %v1515, %v661
        %v1549 = vsel %vm1537, %v1516, %v663
        %v1550 = vsel %vm1537, %v1517, %v665
        %v1551 = vsel %vm1537, %v1518, %v667
        %v1552 = vsel %vm1537, %v1519, %v669
        %v1553 = vsel %vm1537, %v1520, %v671
        %v1554 = vsel %vm1537, %v1521, %v673
        %v1555 = vsel %vm1537, %v1522, %v675
        %v1556 = vsel %vm1537, %v1523, %v677
        %v1557 = vsel %vm1537, %v1524, %v679
        %v1558 = vsel %vm1537, %v1525, %v681
        %v1559 = vsel %vm1537, %v1526, %v683
        %v1560 = vsel %vm1537, %v1527, %v685
        %v1561 = vsel %vm1537, %v1528, %v687
        %v1562 = vsel %vm1537, %v1529, %v689
        %v1563 = vsel %vm1537, %v1530, %v691
        %v1564 = vsel %vm1537, %v1531, %v693
        %v1565 = vsel %vm1537, %v1532, %v695
        %v1566 = vsel %vm1537, %v1533, %v697
        %v1567 = vsel %vm1537, %v1534, %v699
        %v1568 = vsel %vm1537, %v1535, %v701
        %v1569 = vsel %vm1537, %v1536, %v703
        %vm1570 = vcmask 97280
        %v1571 = vsel %vm1570, %v1538, %v769
        %v1572 = vsel %vm1570, %v1539, %v771
        %v1573 = vsel %vm1570, %v1540, %v773
        %v1574 = vsel %vm1570, %v1541, %v775
        %v1575 = vsel %vm1570, %v1542, %v777
        %v1576 = vsel %vm1570, %v1543, %v779
        %v1577 = vsel %vm1570, %v1544, %v781
        %v1578 = vsel %vm1570, %v1545, %v783
        %v1579 = vsel %vm1570, %v1546, %v785
        %v1580 = vsel %vm1570, %v1547, %v787
        %v1581 = vsel %vm1570, %v1548, %v789
        %v1582 = vsel %vm1570, %v1549, %v791
        %v1583 = vsel %vm1570, %v1550, %v793
        %v1584 = vsel %vm1570, %v1551, %v795
        %v1585 = vsel %vm1570, %v1552, %v797
        %v1586 = vsel %vm1570, %v1553, %v799
        %v1587 = vsel %vm1570, %v1554, %v801
        %v1588 = vsel %vm1570, %v1555, %v803
        %v1589 = vsel %vm1570, %v1556, %v805
        %v1590 = vsel %vm1570, %v1557, %v807
        %v1591 = vsel %vm1570, %v1558, %v809
        %v1592 = vsel %vm1570, %v1559, %v811
        %v1593 = vsel %vm1570, %v1560, %v813
        %v1594 = vsel %vm1570, %v1561, %v815
        %v1595 = vsel %vm1570, %v1562, %v817
        %v1596 = vsel %vm1570, %v1563, %v819
        %v1597 = vsel %vm1570, %v1564, %v821
        %v1598 = vsel %vm1570, %v1565, %v823
        %v1599 = vsel %vm1570, %v1566, %v825
        %v1600 = vsel %vm1570, %v1567, %v827
        %v1601 = vsel %vm1570, %v1568, %v829
        %v1602 = vsel %vm1570, %v1569, %v831
        %vm1603 = vcmask 130048
        %v1604 = vsel %vm1603, %v1571, %v897
        %v1605 = vsel %vm1603, %v1572, %v899
        %v1606 = vsel %vm1603, %v1573, %v901
        %v1607 = vsel %vm1603, %v1574, %v903
        %v1608 = vsel %vm1603, %v1575, %v905
        %v1609 = vsel %vm1603, %v1576, %v907
        %v1610 = vsel %vm1603, %v1577, %v909
        %v1611 = vsel %vm1603, %v1578, %v911
        %v1612 = vsel %vm1603, %v1579, %v913
        %v1613 = vsel %vm1603, %v1580, %v915
        %v1614 = vsel %vm1603, %v1581, %v917
        %v1615 = vsel %vm1603, %v1582, %v919
        %v1616 = vsel %vm1603, %v1583, %v921
        %v1617 = vsel %vm1603, %v1584, %v923
        %v1618 = vsel %vm1603, %v1585, %v925
        %v1619 = vsel %vm1603, %v1586, %v927
        %v1620 = vsel %vm1603, %v1587, %v929
        %v1621 = vsel %vm1603, %v1588, %v931
        %v1622 = vsel %vm1603, %v1589, %v933
        %v1623 = vsel %vm1603, %v1590, %v935
        %v1624 = vsel %vm1603, %v1591, %v937
        %v1625 = vsel %vm1603, %v1592, %v939
        %v1626 = vsel %vm1603, %v1593, %v941
        %v1627 = vsel %vm1603, %v1594, %v943
        %v1628 = vsel %vm1603, %v1595, %v945
        %v1629 = vsel %vm1603, %v1596, %v947
        %v1630 = vsel %vm1603, %v1597, %v949
        %v1631 = vsel %vm1603, %v1598, %v951
        %v1632 = vsel %vm1603, %v1599, %v953
        %v1633 = vsel %vm1603, %v1600, %v955
        %v1634 = vsel %vm1603, %v1601, %v957
        %v1635 = vsel %vm1603, %v1602, %v959
        %vm1636 = vcmask 162816
        %v1637 = vsel %vm1636, %v1604, %v1025
        %v1638 = vsel %vm1636, %v1605, %v1027
        %v1639 = vsel %vm1636, %v1606, %v1029
        %v1640 = vsel %vm1636, %v1607, %v1031
        %v1641 = vsel %vm1636, %v1608, %v1033
        %v1642 = vsel %vm1636, %v1609, %v1035
        %v1643 = vsel %vm1636, %v1610, %v1037
        %v1644 = vsel %vm1636, %v1611, %v1039
        %v1645 = vsel %vm1636, %v1612, %v1041
        %v1646 = vsel %vm1636, %v1613, %v1043
        %v1647 = vsel %vm1636, %v1614, %v1045
        %v1648 = vsel %vm1636, %v1615, %v1047
        %v1649 = vsel %vm1636, %v1616, %v1049
        %v1650 = vsel %vm1636, %v1617, %v1051
        %v1651 = vsel %vm1636, %v1618, %v1053
        %v1652 = vsel %vm1636, %v1619, %v1055
        %v1653 = vsel %vm1636, %v1620, %v1057
        %v1654 = vsel %vm1636, %v1621, %v1059
        %v1655 = vsel %vm1636, %v1622, %v1061
        %v1656 = vsel %vm1636, %v1623, %v1063
        %v1657 = vsel %vm1636, %v1624, %v1065
        %v1658 = vsel %vm1636, %v1625, %v1067
        %v1659 = vsel %vm1636, %v1626, %v1069
        %v1660 = vsel %vm1636, %v1627, %v1071
        %v1661 = vsel %vm1636, %v1628, %v1073
        %v1662 = vsel %vm1636, %v1629, %v1075
        %v1663 = vsel %vm1636, %v1630, %v1077
        %v1664 = vsel %vm1636, %v1631, %v1079
        %v1665 = vsel %vm1636, %v1632, %v1081
        %v1666 = vsel %vm1636, %v1633, %v1083
        %v1667 = vsel %vm1636, %v1634, %v1085
        %v1668 = vsel %vm1636, %v1635, %v1087
        %vm1669 = vcmask 195584
        %v1670 = vsel %vm1669, %v1637, %v1153
        %v1671 = vsel %vm1669, %v1638, %v1155
        %v1672 = vsel %vm1669, %v1639, %v1157
        %v1673 = vsel %vm1669, %v1640, %v1159
        %v1674 = vsel %vm1669, %v1641, %v1161
        %v1675 = vsel %vm1669, %v1642, %v1163
        %v1676 = vsel %vm1669, %v1643, %v1165
        %v1677 = vsel %vm1669, %v1644, %v1167
        %v1678 = vsel %vm1669, %v1645, %v1169
        %v1679 = vsel %vm1669, %v1646, %v1171
        %v1680 = vsel %vm1669, %v1647, %v1173
        %v1681 = vsel %vm1669, %v1648, %v1175
        %v1682 = vsel %vm1669, %v1649, %v1177
        %v1683 = vsel %vm1669, %v1650, %v1179
        %v1684 = vsel %vm1669, %v1651, %v1181
        %v1685 = vsel %vm1669, %v1652, %v1183
        %v1686 = vsel %vm1669, %v1653, %v1185
        %v1687 = vsel %vm1669, %v1654, %v1187
        %v1688 = vsel %vm1669, %v1655, %v1189
        %v1689 = vsel %vm1669, %v1656, %v1191
        %v1690 = vsel %vm1669, %v1657, %v1193
        %v1691 = vsel %vm1669, %v1658, %v1195
        %v1692 = vsel %vm1669, %v1659, %v1197
        %v1693 = vsel %vm1669, %v1660, %v1199
        %v1694 = vsel %vm1669, %v1661, %v1201
        %v1695 = vsel %vm1669, %v1662, %v1203
        %v1696 = vsel %vm1669, %v1663, %v1205
        %v1697 = vsel %vm1669, %v1664, %v1207
        %v1698 = vsel %vm1669, %v1665, %v1209
        %v1699 = vsel %vm1669, %v1666, %v1211
        %v1700 = vsel %vm1669, %v1667, %v1213
        %v1701 = vsel %vm1669, %v1668, %v1215
        %vm1702 = vcmask 228352
        %v1703 = vsel %vm1702, %v1670, %v1281
        %v1704 = vsel %vm1702, %v1671, %v1283
        %v1705 = vsel %vm1702, %v1672, %v1285
        %v1706 = vsel %vm1702, %v1673, %v1287
        %v1707 = vsel %vm1702, %v1674, %v1289
        %v1708 = vsel %vm1702, %v1675, %v1291
        %v1709 = vsel %vm1702, %v1676, %v1293
        %v1710 = vsel %vm1702, %v1677, %v1295
        %v1711 = vsel %vm1702, %v1678, %v1297
        %v1712 = vsel %vm1702, %v1679, %v1299
        %v1713 = vsel %vm1702, %v1680, %v1301
        %v1714 = vsel %vm1702, %v1681, %v1303
        %v1715 = vsel %vm1702, %v1682, %v1305
        %v1716 = vsel %vm1702, %v1683, %v1307
        %v1717 = vsel %vm1702, %v1684, %v1309
        %v1718 = vsel %vm1702, %v1685, %v1311
        %v1719 = vsel %vm1702, %v1686, %v1313
        %v1720 = vsel %vm1702, %v1687, %v1315
        %v1721 = vsel %vm1702, %v1688, %v1317
        %v1722 = vsel %vm1702, %v1689, %v1319
        %v1723 = vsel %vm1702, %v1690, %v1321
        %v1724 = vsel %vm1702, %v1691, %v1323
        %v1725 = vsel %vm1702, %v1692, %v1325
        %v1726 = vsel %vm1702, %v1693, %v1327
        %v1727 = vsel %vm1702, %v1694, %v1329
        %v1728 = vsel %vm1702, %v1695, %v1331
        %v1729 = vsel %vm1702, %v1696, %v1333
        %v1730 = vsel %vm1702, %v1697, %v1335
        %v1731 = vsel %vm1702, %v1698, %v1337
        %v1732 = vsel %vm1702, %v1699, %v1339
        %v1733 = vsel %vm1702, %v1700, %v1341
        %v1734 = vsel %vm1702, %v1701, %v1343
        %vm1735 = vcmask 261120
        %v1736 = vsel %vm1735, %v1703, %v1409
        %v1737 = vsel %vm1735, %v1704, %v1411
        %v1738 = vsel %vm1735, %v1705, %v1413
        %v1739 = vsel %vm1735, %v1706, %v1415
        %v1740 = vsel %vm1735, %v1707, %v1417
        %v1741 = vsel %vm1735, %v1708, %v1419
        %v1742 = vsel %vm1735, %v1709, %v1421
        %v1743 = vsel %vm1735, %v1710, %v1423
        %v1744 = vsel %vm1735, %v1711, %v1425
        %v1745 = vsel %vm1735, %v1712, %v1427
        %v1746 = vsel %vm1735, %v1713, %v1429
        %v1747 = vsel %vm1735, %v1714, %v1431
        %v1748 = vsel %vm1735, %v1715, %v1433
        %v1749 = vsel %vm1735, %v1716, %v1435
        %v1750 = vsel %vm1735, %v1717, %v1437
        %v1751 = vsel %vm1735, %v1718, %v1439
        %v1752 = vsel %vm1735, %v1719, %v1441
        %v1753 = vsel %vm1735, %v1720, %v1443
        %v1754 = vsel %vm1735, %v1721, %v1445
        %v1755 = vsel %vm1735, %v1722, %v1447
        %v1756 = vsel %vm1735, %v1723, %v1449
        %v1757 = vsel %vm1735, %v1724, %v1451
        %v1758 = vsel %vm1735, %v1725, %v1453
        %v1759 = vsel %vm1735, %v1726, %v1455
        %v1760 = vsel %vm1735, %v1727, %v1457
        %v1761 = vsel %vm1735, %v1728, %v1459
        %v1762 = vsel %vm1735, %v1729, %v1461
        %v1763 = vsel %vm1735, %v1730, %v1463
        %v1764 = vsel %vm1735, %v1731, %v1465
        %v1765 = vsel %vm1735, %v1732, %v1467
        %v1766 = vsel %vm1735, %v1733, %v1469
        %v1767 = vsel %vm1735, %v1734, %v1471
        %v1768 = vld [vmem:[%s181] sm:$0xff]
        %v1769 = vld [vmem:[%s181 + $0x8] sm:$0xff]
        %v1770 = vld [vmem:[%s181 + $0x10] sm:$0xff]
        %v1771 = vld [vmem:[%s181 + $0x18] sm:$0xff]
        %v1772 = vld [vmem:[%s181 + $0x20] sm:$0xf]
        %vm1773 = vcmask 293888
        %v1775 = vsel %vm1773, %v1736, 0
        %v1778 = vsel %vm1773, %v1737, 0
        %v1781 = vsel %vm1773, %v1738, 0
        %v1784 = vsel %vm1773, %v1739, 0
        %v1787 = vsel %vm1773, %v1740, 0
        %v1790 = vsel %vm1773, %v1741, 0
        %v1793 = vsel %vm1773, %v1742, 0
        %v1796 = vsel %vm1773, %v1743, 0
        %v1799 = vsel %vm1773, %v1744, 0
        %v1802 = vsel %vm1773, %v1745, 0
        %v1805 = vsel %vm1773, %v1746, 0
        %v1808 = vsel %vm1773, %v1747, 0
        %v1811 = vsel %vm1773, %v1748, 0
        %v1814 = vsel %vm1773, %v1749, 0
        %v1817 = vsel %vm1773, %v1750, 0
        %v1820 = vsel %vm1773, %v1751, 0
        %v1823 = vsel %vm1773, %v1752, 0
        %v1826 = vsel %vm1773, %v1753, 0
        %v1829 = vsel %vm1773, %v1754, 0
        %v1832 = vsel %vm1773, %v1755, 0
        %v1835 = vsel %vm1773, %v1756, 0
        %v1838 = vsel %vm1773, %v1757, 0
        %v1841 = vsel %vm1773, %v1758, 0
        %v1844 = vsel %vm1773, %v1759, 0
        %v1847 = vsel %vm1773, %v1760, 0
        %v1850 = vsel %vm1773, %v1761, 0
        %v1853 = vsel %vm1773, %v1762, 0
        %v1856 = vsel %vm1773, %v1763, 0
        %v1859 = vsel %vm1773, %v1764, 0
        %v1862 = vsel %vm1773, %v1765, 0
        %v1865 = vsel %vm1773, %v1766, 0
        %v1868 = vsel %vm1773, %v1767, 0
        %vm1870 = vcmask 1043456
        %v1872 = vsel %vm1870, %v1772, 0
        %1874 = vmatprep.subr.mxu0 0.0
        %1875 = vmatpush1.msra.mxu0 %v1768
        %1876 = vmatprep.subr.mxu0 0.0
        %1877 = vmatpush1.msra.mxu0 %v1769
        %1878 = vmatprep.subr.mxu0 0.0
        %1879 = vmatpush1.msra.mxu0 %v1770
        %1880 = vmatprep.subr.mxu0 0.0
        %1881 = vmatpush1.msra.mxu0 %v1771
        %1882 = vmatprep.subr.mxu0 0.0
        %1883 = vmatpush1.msra.mxu0 %v1872
        %1884 = vmatprep.subr.mxu0 0.0
        %1885 = vmatpush1.msra.mxu0 0.0
        %1886 = vmatprep.subr.mxu0 0.0
        %1887 = vmatpush1.msra.mxu0 0.0
        %1888 = vmatprep.subr.mxu0 0.0
        %1889 = vmatpush1.msra.mxu0 0.0
        %1890 = vmatprep.subr.mxu0 0.0
        %1891 = vmatpush1.msra.mxu0 0.0
        %1892 = vmatprep.subr.mxu0 0.0
        %1893 = vmatpush1.msra.mxu0 0.0
        %1894 = vmatprep.subr.mxu0 0.0
        %1895 = vmatpush1.msra.mxu0 0.0
        %1896 = vmatprep.subr.mxu0 0.0
        %1897 = vmatpush1.msra.mxu0 0.0
        %1898 = vmatprep.subr.mxu0 0.0
        %1899 = vmatpush1.msra.mxu0 0.0
        %1900 = vmatprep.subr.mxu0 0.0
        %1901 = vmatpush1.msra.mxu0 0.0
        %1902 = vmatprep.subr.mxu0 0.0
        %1903 = vmatpush1.msra.mxu0 0.0
        %1904 = vmatprep.subr.mxu0 0.0
        %1905 = vmatpush1.msra.mxu0 0.0
        %1906 = vmatprep.subr.mxu0 0.0
        %1907 = vmatpush1.msra.mxu0 0.0
        %1908 = vmatprep.subr.mxu0 0.0
        %1909 = vmatpush1.msra.mxu0 0.0
        %1910 = vmatprep.subr.mxu0 0.0
        %1911 = vmatpush1.msra.mxu0 0.0
        %1912 = vmatprep.subr.mxu0 0.0
        %1913 = vmatpush1.msra.mxu0 0.0
        %1914 = vmatprep.subr.mxu0 0.0
        %1915 = vmatpush1.msra.mxu0 0.0
        %1916 = vmatprep.subr.mxu0 0.0
        %1917 = vmatpush1.msra.mxu0 0.0
        %1918 = vmatprep.subr.mxu0 0.0
        %1919 = vmatpush1.msra.mxu0 0.0
        %1920 = vmatprep.subr.mxu0 0.0
        %1921 = vmatpush1.msra.mxu0 0.0
        %1922 = vmatprep.subr.mxu0 0.0
        %1923 = vmatpush1.msra.mxu0 0.0
        %1924 = vmatprep.subr.mxu0 0.0
        %1925 = vmatpush1.msra.mxu0 0.0
        %1926 = vmatprep.subr.mxu0 0.0
        %1927 = vmatpush1.msra.mxu0 0.0
        %1928 = vmatprep.subr.mxu0 0.0
        %1929 = vmatpush1.msra.mxu0 0.0
        %1930 = vmatprep.subr.mxu0 0.0
        %1931 = vmatpush1.msra.mxu0 0.0
        %1932 = vmatprep.subr.mxu0 0.0
        %1933 = vmatpush1.msra.mxu0 0.0
        %1934 = vmatprep.subr.mxu0 0.0
        %1935 = vmatpush1.msra.mxu0 0.0
        %1936 = vmatprep.subr.mxu0 0.0
        %1937 = vmatpush1.msra.mxu0 0.0
        %1938 = vmatprep.mubr.f32.mxu0 0.0
        %1939 = vmatmul.mubr.f32.gmra.mrb[0].mxu0 %v1775
        %v1940 = vpop.f32.mrb[0].mxu0
        %v1941 = vadd.f32 0.0, %v1940
        %v1942 = vpop.f32.mrb[0].mxu0
        %1943 = vmatprep.mubr.f32.mxu0 0.0
        %1944 = vmatmul.mubr.f32.gmra.mrb[0].mxu0 %v1778
        %v1945 = vpop.f32.mrb[0].mxu0
        %v1946 = vadd.f32 0.0, %v1945
        %v1947 = vpop.f32.mrb[0].mxu0
        %1948 = vmatprep.mubr.f32.mxu0 0.0
        %1949 = vmatmul.mubr.f32.gmra.mrb[0].mxu0 %v1781
        %v1950 = vpop.f32.mrb[0].mxu0
        %v1951 = vadd.f32 0.0, %v1950
        %v1952 = vpop.f32.mrb[0].mxu0
        %1953 = vmatprep.mubr.f32.mxu0 0.0
        %1954 = vmatmul.mubr.f32.gmra.mrb[0].mxu0 %v1784
        %v1955 = vpop.f32.mrb[0].mxu0
        %v1956 = vadd.f32 0.0, %v1955
        %v1957 = vpop.f32.mrb[0].mxu0
        %1958 = vmatprep.mubr.f32.mxu0 0.0
        %1959 = vmatmul.mubr.f32.gmra.mrb[0].mxu0 %v1787
        %v1960 = vpop.f32.mrb[0].mxu0
        %v1961 = vadd.f32 0.0, %v1960
        %v1962 = vpop.f32.mrb[0].mxu0
        %1963 = vmatprep.mubr.f32.mxu0 0.0
        %1964 = vmatmul.mubr.f32.gmra.mrb[0].mxu0 %v1790
        %v1965 = vpop.f32.mrb[0].mxu0
        %v1966 = vadd.f32 0.0, %v1965
        %v1967 = vpop.f32.mrb[0].mxu0
        %1968 = vmatprep.mubr.f32.mxu0 0.0
        %1969 = vmatmul.mubr.f32.gmra.mrb[0].mxu0 %v1793
        %v1970 = vpop.f32.mrb[0].mxu0
        %v1971 = vadd.f32 0.0, %v1970
        %v1972 = vpop.f32.mrb[0].mxu0
        %1973 = vmatprep.mubr.f32.mxu0 0.0
        %1974 = vmatmul.mubr.f32.gmra.mrb[0].mxu0 %v1796
        %v1975 = vpop.f32.mrb[0].mxu0
        %v1976 = vadd.f32 0.0, %v1975
        %v1977 = vpop.f32.mrb[0].mxu0
        %1978 = vmatprep.mubr.f32.mxu0 0.0
        %1979 = vmatmul.mubr.f32.gmra.mrb[0].mxu0 %v1799
        %v1980 = vpop.f32.mrb[0].mxu0
        %v1981 = vadd.f32 0.0, %v1980
        %v1982 = vpop.f32.mrb[0].mxu0
        %1983 = vmatprep.mubr.f32.mxu0 0.0
        %1984 = vmatmul.mubr.f32.gmra.mrb[0].mxu0 %v1802
        %v1985 = vpop.f32.mrb[0].mxu0
        %v1986 = vadd.f32 0.0, %v1985
        %v1987 = vpop.f32.mrb[0].mxu0
        %1988 = vmatprep.mubr.f32.mxu0 0.0
        %1989 = vmatmul.mubr.f32.gmra.mrb[0].mxu0 %v1805
        %v1990 = vpop.f32.mrb[0].mxu0
        %v1991 = vadd.f32 0.0, %v1990
        %v1992 = vpop.f32.mrb[0].mxu0
        %1993 = vmatprep.mubr.f32.mxu0 0.0
        %1994 = vmatmul.mubr.f32.gmra.mrb[0].mxu0 %v1808
        %v1995 = vpop.f32.mrb[0].mxu0
        %v1996 = vadd.f32 0.0, %v1995
        %v1997 = vpop.f32.mrb[0].mxu0
        %1998 = vmatprep.mubr.f32.mxu0 0.0
        %1999 = vmatmul.mubr.f32.gmra.mrb[0].mxu0 %v1811
        %v2000 = vpop.f32.mrb[0].mxu0
        %v2001 = vadd.f32 0.0, %v2000
        %v2002 = vpop.f32.mrb[0].mxu0
        %2003 = vmatprep.mubr.f32.mxu0 0.0
        %2004 = vmatmul.mubr.f32.gmra.mrb[0].mxu0 %v1814
        %v2005 = vpop.f32.mrb[0].mxu0
        %v2006 = vadd.f32 0.0, %v2005
        %v2007 = vpop.f32.mrb[0].mxu0
        %2008 = vmatprep.mubr.f32.mxu0 0.0
        %2009 = vmatmul.mubr.f32.gmra.mrb[0].mxu0 %v1817
        %v2010 = vpop.f32.mrb[0].mxu0
        %v2011 = vadd.f32 0.0, %v2010
        %v2012 = vpop.f32.mrb[0].mxu0
        %2013 = vmatprep.mubr.f32.mxu0 0.0
        %2014 = vmatmul.mubr.f32.gmra.mrb[0].mxu0 %v1820
        %v2015 = vpop.f32.mrb[0].mxu0
        %v2016 = vadd.f32 0.0, %v2015
        %v2017 = vpop.f32.mrb[0].mxu0
        %2018 = vmatprep.mubr.f32.mxu0 0.0
        %2019 = vmatmul.mubr.f32.gmra.mrb[0].mxu0 %v1823
        %v2020 = vpop.f32.mrb[0].mxu0
        %v2021 = vadd.f32 0.0, %v2020
        %v2022 = vpop.f32.mrb[0].mxu0
        %2023 = vmatprep.mubr.f32.mxu0 0.0
        %2024 = vmatmul.mubr.f32.gmra.mrb[0].mxu0 %v1826
        %v2025 = vpop.f32.mrb[0].mxu0
        %v2026 = vadd.f32 0.0, %v2025
        %v2027 = vpop.f32.mrb[0].mxu0
        %2028 = vmatprep.mubr.f32.mxu0 0.0
        %2029 = vmatmul.mubr.f32.gmra.mrb[0].mxu0 %v1829
        %v2030 = vpop.f32.mrb[0].mxu0
        %v2031 = vadd.f32 0.0, %v2030
        %v2032 = vpop.f32.mrb[0].mxu0
        %2033 = vmatprep.mubr.f32.mxu0 0.0
        %2034 = vmatmul.mubr.f32.gmra.mrb[0].mxu0 %v1832
        %v2035 = vpop.f32.mrb[0].mxu0
        %v2036 = vadd.f32 0.0, %v2035
        %v2037 = vpop.f32.mrb[0].mxu0
        %2038 = vmatprep.mubr.f32.mxu0 0.0
        %2039 = vmatmul.mubr.f32.gmra.mrb[0].mxu0 %v1835
        %v2040 = vpop.f32.mrb[0].mxu0
        %v2041 = vadd.f32 0.0, %v2040
        %v2042 = vpop.f32.mrb[0].mxu0
        %2043 = vmatprep.mubr.f32.mxu0 0.0
        %2044 = vmatmul.mubr.f32.gmra.mrb[0].mxu0 %v1838
        %v2045 = vpop.f32.mrb[0].mxu0
        %v2046 = vadd.f32 0.0, %v2045
        %v2047 = vpop.f32.mrb[0].mxu0
        %2048 = vmatprep.mubr.f32.mxu0 0.0
        %2049 = vmatmul.mubr.f32.gmra.mrb[0].mxu0 %v1841
        %v2050 = vpop.f32.mrb[0].mxu0
        %v2051 = vadd.f32 0.0, %v2050
        %v2052 = vpop.f32.mrb[0].mxu0
        %2053 = vmatprep.mubr.f32.mxu0 0.0
        %2054 = vmatmul.mubr.f32.gmra.mrb[0].mxu0 %v1844
        %v2055 = vpop.f32.mrb[0].mxu0
        %v2056 = vadd.f32 0.0, %v2055
        %v2057 = vpop.f32.mrb[0].mxu0
        %2058 = vmatprep.mubr.f32.mxu0 0.0
        %2059 = vmatmul.mubr.f32.gmra.mrb[0].mxu0 %v1847
        %v2060 = vpop.f32.mrb[0].mxu0
        %v2061 = vadd.f32 0.0, %v2060
        %v2062 = vpop.f32.mrb[0].mxu0
        %2063 = vmatprep.mubr.f32.mxu0 0.0
        %2064 = vmatmul.mubr.f32.gmra.mrb[0].mxu0 %v1850
        %v2065 = vpop.f32.mrb[0].mxu0
        %v2066 = vadd.f32 0.0, %v2065
        %v2067 = vpop.f32.mrb[0].mxu0
        %2068 = vmatprep.mubr.f32.mxu0 0.0
        %2069 = vmatmul.mubr.f32.gmra.mrb[0].mxu0 %v1853
        %v2070 = vpop.f32.mrb[0].mxu0
        %v2071 = vadd.f32 0.0, %v2070
        %v2072 = vpop.f32.mrb[0].mxu0
        %2073 = vmatprep.mubr.f32.mxu0 0.0
        %2074 = vmatmul.mubr.f32.gmra.mrb[0].mxu0 %v1856
        %v2075 = vpop.f32.mrb[0].mxu0
        %v2076 = vadd.f32 0.0, %v2075
        %v2077 = vpop.f32.mrb[0].mxu0
        %2078 = vmatprep.mubr.f32.mxu0 0.0
        %2079 = vmatmul.mubr.f32.gmra.mrb[0].mxu0 %v1859
        %v2080 = vpop.f32.mrb[0].mxu0
        %v2081 = vadd.f32 0.0, %v2080
        %v2082 = vpop.f32.mrb[0].mxu0
        %2083 = vmatprep.mubr.f32.mxu0 0.0
        %2084 = vmatmul.mubr.f32.gmra.mrb[0].mxu0 %v1862
        %v2085 = vpop.f32.mrb[0].mxu0
        %v2086 = vadd.f32 0.0, %v2085
        %v2087 = vpop.f32.mrb[0].mxu0
        %2088 = vmatprep.mubr.f32.mxu0 0.0
        %2089 = vmatmul.mubr.f32.gmra.mrb[0].mxu0 %v1865
        %v2090 = vpop.f32.mrb[0].mxu0
        %v2091 = vadd.f32 0.0, %v2090
        %v2092 = vpop.f32.mrb[0].mxu0
        %2093 = vmatprep.mubr.f32.mxu0 0.0
        %2094 = vmatmul.mubr.f32.gmra.mrb[0].mxu0 %v1868
        %v2095 = vpop.f32.mrb[0].mxu0
        %v2096 = vadd.f32 0.0, %v2095
        %v2097 = vpop.f32.mrb[0].mxu0
        %2098 = vdwg.mxu0
        %2099 = vst [vmem:[%s172] sm:$0xff] %v1941
        %2100 = vst [vmem:[%s172 + $0x8] sm:$0xff] %v1946
        %2101 = vst [vmem:[%s172 + $0x10] sm:$0xff] %v1951
        %2102 = vst [vmem:[%s172 + $0x18] sm:$0xff] %v1956
        %2103 = vst [vmem:[%s172 + $0x20] sm:$0xff] %v1961
        %2104 = vst [vmem:[%s172 + $0x28] sm:$0xff] %v1966
        %2105 = vst [vmem:[%s172 + $0x30] sm:$0xff] %v1971
        %2106 = vst [vmem:[%s172 + $0x38] sm:$0xff] %v1976
        %2107 = vst [vmem:[%s172 + $0x40] sm:$0xff] %v1981
        %2108 = vst [vmem:[%s172 + $0x48] sm:$0xff] %v1986
        %2109 = vst [vmem:[%s172 + $0x50] sm:$0xff] %v1991
        %2110 = vst [vmem:[%s172 + $0x58] sm:$0xff] %v1996
        %2111 = vst [vmem:[%s172 + $0x60] sm:$0xff] %v2001
        %2112 = vst [vmem:[%s172 + $0x68] sm:$0xff] %v2006
        %2113 = vst [vmem:[%s172 + $0x70] sm:$0xff] %v2011
        %2114 = vst [vmem:[%s172 + $0x78] sm:$0xff] %v2016
        %2115 = vst [vmem:[%s172 + $0x80] sm:$0xff] %v2021
        %2116 = vst [vmem:[%s172 + $0x88] sm:$0xff] %v2026
        %2117 = vst [vmem:[%s172 + $0x90] sm:$0xff] %v2031
        %2118 = vst [vmem:[%s172 + $0x98] sm:$0xff] %v2036
        %2119 = vst [vmem:[%s172 + $0xa0] sm:$0xff] %v2041
        %2120 = vst [vmem:[%s172 + $0xa8] sm:$0xff] %v2046
        %2121 = vst [vmem:[%s172 + $0xb0] sm:$0xff] %v2051
        %2122 = vst [vmem:[%s172 + $0xb8] sm:$0xff] %v2056
        %2123 = vst [vmem:[%s172 + $0xc0] sm:$0xff] %v2061
        %2124 = vst [vmem:[%s172 + $0xc8] sm:$0xff] %v2066
        %2125 = vst [vmem:[%s172 + $0xd0] sm:$0xff] %v2071
        %2126 = vst [vmem:[%s172 + $0xd8] sm:$0xff] %v2076
        %2127 = vst [vmem:[%s172 + $0xe0] sm:$0xff] %v2081
        %2128 = vst [vmem:[%s172 + $0xe8] sm:$0xff] %v2086
        %2129 = vst [vmem:[%s172 + $0xf0] sm:$0xff] %v2091
        %2130 = vst [vmem:[%s172 + $0xf8] sm:$0xff] %v2096
        %s2131 = sand.u32 %s99, 1
        %s2132 = scalar_lea.sflag [#allocation3], %s2131
        %s2133 = sand.u32 %s99, 1
        %s2134 = smul.addr %s2133, 256
        %s2135 = scalar_lea.vmem [#allocation2], %s2134
        // Predicated region
        $region29: #{tpu_custom_call.1} parent=27 // pred_check
          %p2136 = pneg %p109
        $region30: #{tpu_custom_call.1} parent=27 // pred_check_branch
          %2138 = sbr.rel (%p2136) target = $region32
        $region31: #{tpu_custom_call.1} parent=27 // pred_region
          %s2139 = smul.u32 32, %s23
          %s2141 = ssub.s32 4096, 4096
          %2142 = vsyncadd %s2132, %s2141
          %s2143 = sadd.s32 %s22, %s2139
          %s2144 = smul.addr %s21, 32
          %s2145 = sadd.s32 %s2143, %s2144
          %s2146 = smul.addr %s2145, 128
          %s2147 = scalar_lea.hbm %s2, %s2146
          %s2148 = sshll.u32 %s2135, 4
          %s2149 = int_to_ptr.vmem [resolvable:$true] %s2148
          %2154 = dma.vmem_to_hbm [thread:$0]  %s2149, 4096, %s2147, %s2132, 128, 128, 8
        $region32: #{tpu_custom_call.1} parent=27 // pred_fallthru
          _
      $region28: #{tpu_custom_call.1} parent=5 // pred_fallthru
        _
      %p2155 = scmp.le.s32.totalorder 2, %s11
      // Predicated region
      $region33: #{tpu_custom_call.1} parent=5 // pred_check
        %p2156 = pneg %p2155
      $region34: #{tpu_custom_call.1} parent=5 // pred_check_branch
        %2158 = sbr.rel (%p2156) target = $region36
      $region35: #{tpu_custom_call.1} parent=5 // pred_region
        %s2159 = ssub.s32 %s11, 2
        // Predicated region
        $region37: #{tpu_custom_call.1} parent=35 // pred_check
          %p2160 = pneg %p115
        $region38: #{tpu_custom_call.1} parent=35 // pred_check_branch
          %2162 = sbr.rel (%p2160) target = $region40
        $region39: #{tpu_custom_call.1} parent=35 // pred_region
          %s2163 = sand.u32 %s100, 1
          %s2164 = scalar_lea.sflag [#allocation3], %s2163
          %s2165 = sand.u32 %s100, 1
          %s2166 = smul.addr %s2165, 256
          %s2167 = scalar_lea.vmem [#allocation2], %s2166
          %2168 = dma.done %s2164, 4096
        $region40: #{tpu_custom_call.1} parent=35 // pred_fallthru
          _
      $region36: #{tpu_custom_call.1} parent=5 // pred_fallthru
        _
    $region6: #{tpu_custom_call.1} parent=1 // loop_footer
      %s15 = sadd.s32 1, %s11
    $region7: #{tpu_custom_call.1} parent=1 // loop_footer_branch
      %10 = sbr.rel target = $region3
    $region8: #{tpu_custom_call.1} parent=1 // loop_exit
      _
    %2169 = vsyncpa [#allocation3], 1
    %s2170 = scalar_lea.sflag [#allocation3], 1
    %2171 = vsyncpa %s2170, 1

</llo_original>
